<compile_context>
chip_gen: v7x
topology: tpu7x:2x2x1
jax: 0.10.0
libtpu: 0.0.40
codegen_flags: <defaults>
</compile_context>

<pallas_src>
import math
import functools

import jax
import jax.numpy as jnp
from jax import lax
from jax.experimental import pallas as pl
from jax.experimental.pallas import tpu as pltpu


def mha_kernel(xq_ref, xkv_ref,
               wq_ref, bq_ref, wkv_ref, bkv_ref, wo_ref, bo_ref,
               o_ref, *, n_heads, nb, s_q, s_kv):
    """One grid step handles `nb` batch elements.

    xq_ref  : (nb*s_q,  d)   xkv_ref : (nb*s_kv, d)
    wq_ref  : (d, d)    pre-transposed, pre-scaled by 1/sqrt(d_head)
    wkv_ref : (d, 2d)   pre-transposed, fused [W_k^T | W_v^T]
    wo_ref  : (d, d)    pre-transposed
    b*_ref  : (1, d) / (1, 2d)
    o_ref   : (nb*s_q,  d)
    """
    d = xq_ref.shape[-1]
    dh = d // n_heads

    # Projections over the whole folded batch: no in-kernel transposes, no
    # per-score scale (already folded into W_q/b_q), K/V fused in one matmul.
    q = jnp.dot(xq_ref[...], wq_ref[...],
                preferred_element_type=jnp.float32) + bq_ref[0]          # (nb*s_q, d)
    kv = jnp.dot(xkv_ref[...], wkv_ref[...],
                 preferred_element_type=jnp.float32) + bkv_ref[0]        # (nb*s_kv, 2d)
    k = kv[:, :d]
    v = kv[:, d:]

    # q @ k^T without materializing k.T: contract the last dim of both.
    dn = (((1,), (1,)), ((), ()))

    outs = []
    for b in range(nb):                       # static, tiny (nb <= 2 here)
        qb = q[b * s_q:(b + 1) * s_q, :]
        kb = k[b * s_kv:(b + 1) * s_kv, :]
        vb = v[b * s_kv:(b + 1) * s_kv, :]
        heads = []
        for h in range(n_heads):              # static, tiny per-head tiles
            sl = slice(h * dh, (h + 1) * dh)
            s = lax.dot_general(qb[:, sl], kb[:, sl], dn,
                                preferred_element_type=jnp.float32)      # (s_q, s_kv)
            s = s - jnp.max(s, axis=-1, keepdims=True)
            p = jnp.exp(s)
            # Softmax divide on the EUP (approximate reciprocal) instead of VALU.
            p = p * pl.reciprocal(jnp.sum(p, axis=-1, keepdims=True), approx=True)
            heads.append(jnp.dot(p, vb[:, sl],
                                 preferred_element_type=jnp.float32))    # (s_q, dh)
        outs.append(jnp.concatenate(heads, axis=-1))                     # (s_q, d)

    a = jnp.concatenate(outs, axis=0) if nb > 1 else outs[0]             # (nb*s_q, d)

    # Single output projection for the whole folded batch.
    o_ref[...] = (jnp.dot(a, wo_ref[...], preferred_element_type=jnp.float32)
                  + bo_ref[0]).astype(o_ref.dtype)


def multihead_attention(x_q, x_kv, params, n_heads, batch_per_step=None):
    """Pallas wrapper.

    batch_per_step=None (default): fold the whole batch into one grid step
        (best on single-TensorCore v5e/v6e — no per-step pipeline overhead,
        one large projection matmul per weight).
    batch_per_step=1: grid=(B,) tagged "parallel" so v7x's two TensorCores
        each take half the batch.
    """
    B, s_q, d = x_q.shape
    s_kv = x_kv.shape[1]
    wq, bq, wk, bk, wv, bv, wo, bo = params

    if batch_per_step is None:
        batch_per_step = B
    assert B % batch_per_step == 0
    nb = batch_per_step
    n_steps = B // nb

    dh = d // n_heads
    scale = 1.0 / math.sqrt(dh)

    # ---- host-side weight prep (hoisted out of the kernel) ----
    wq_t = (wq.T * scale).astype(jnp.float32)           # torch y = x @ W.T + b
    bq_s = (bq * scale).reshape(1, d)
    wkv_t = jnp.concatenate([wk.T, wv.T], axis=1)        # (d, 2d) fused K/V
    bkv = jnp.concatenate([bk, bv]).reshape(1, 2 * d)
    wo_t = wo.T
    bo2 = bo.reshape(1, d)

    xq2 = x_q.reshape(B * s_q, d)
    xkv2 = x_kv.reshape(B * s_kv, d)

    kernel = functools.partial(mha_kernel, n_heads=n_heads,
                               nb=nb, s_q=s_q, s_kv=s_kv)

    def const_spec(shape):
        return pl.BlockSpec(shape, lambda i: (0, 0))     # weights stay resident

    out = pl.pallas_call(
        kernel,
        out_shape=jax.ShapeDtypeStruct((B * s_q, d), x_q.dtype),
        grid=(n_steps,),
        in_specs=[
            pl.BlockSpec((nb * s_q, d), lambda i: (i, 0)),    # x_q  (flattened)
            pl.BlockSpec((nb * s_kv, d), lambda i: (i, 0)),   # x_kv (flattened)
            const_spec((d, d)), const_spec((1, d)),           # W_q^T (scaled), b_q
            const_spec((d, 2 * d)), const_spec((1, 2 * d)),   # [W_k|W_v]^T, b_kv
            const_spec((d, d)), const_spec((1, d)),           # W_out^T, b_out
        ],
        out_specs=pl.BlockSpec((nb * s_q, d), lambda i: (i, 0)),
        compiler_params=pltpu.CompilerParams(dimension_semantics=("parallel",)),
    )(xq2, xkv2, wq_t, bq_s, wkv_t, bkv, wo_t, bo2)
    return out.reshape(B, s_q, d)


# ---------------------------------------------------------------------------
# Deterministic parameter init (mirrors the module's __init__)
# ---------------------------------------------------------------------------
def init_params(key, d, n_heads):
    kq, kk, kv, ko = jax.random.split(key, 4)
    # xavier_uniform with gain = 1/sqrt(2) for W_q, W_k, W_v (n_heads > 1 path)
    gain = 1.0 / math.sqrt(2.0)
    limit = gain * math.sqrt(6.0 / (d + d))
    wq = jax.random.uniform(kq, (d, d), jnp.float32, -limit, limit)
    wk = jax.random.uniform(kk, (d, d), jnp.float32, -limit, limit)
    wv = jax.random.uniform(kv, (d, d), jnp.float32, -limit, limit)
    # W_out: default nn.Linear init (uniform bound 1/sqrt(fan_in))
    bound = 1.0 / math.sqrt(d)
    wo = jax.random.uniform(ko, (d, d), jnp.float32, -bound, bound)
    # biases zero-initialized in the module
    bq = jnp.zeros((d,), jnp.float32)
    bk = jnp.zeros((d,), jnp.float32)
    bv = jnp.zeros((d,), jnp.float32)
    bo = jnp.zeros((d,), jnp.float32)
    return (wq, bq, wk, bk, wv, bv, wo, bo)


# Pure-JAX reference (direct transcription of the PyTorch forward)
def ref_mha(x_q, x_kv, params, n_heads):
    wq, bq, wk, bk, wv, bv, wo, bo = params
    q = x_q @ wq.T + bq
    k = x_kv @ wk.T + bk
    v = x_kv @ wv.T + bv
    B, Sq, d = q.shape
    dh = d // n_heads

    def split(t):
        return t.reshape(B, -1, n_heads, dh).transpose(0, 2, 1, 3)

    qh, kh, vh = split(q), split(k), split(v)
    logits = jnp.einsum('bhqd,bhkd->bhqk', qh, kh) / math.sqrt(dh)
    attn = jax.nn.softmax(logits, axis=-1)
    x = jnp.einsum('bhqk,bhkd->bhqd', attn, vh)
    x = x.transpose(0, 2, 1, 3).reshape(B, Sq, d)
    return x @ wo.T + bo


if __name__ == "__main__":
    B, Sq, Skv, d, n_heads = 2, 8, 8, 32, 4

    key = jax.random.PRNGKey(0)
    k_xq, k_xkv, k_par = jax.random.split(key, 3)
    x_q = jax.random.normal(k_xq, (B, Sq, d), jnp.float32)
    x_kv = jax.random.normal(k_xkv, (B, Skv, d), jnp.float32)
    params = init_params(k_par, d, n_heads)

    ref = ref_mha(x_q, x_kv, params, n_heads)

    # Folded-batch path (single grid step) — v5e/v6e recommendation.
    out_folded = jax.block_until_ready(
        multihead_attention(x_q, x_kv, params, n_heads))
    # Parallel-batch path (grid=(B,), "parallel") — lets v7x's 2 TCs split work.
    out_parallel = jax.block_until_ready(
        multihead_attention(x_q, x_kv, params, n_heads, batch_per_step=1))

    # Tolerance allows for the approximate EUP reciprocal in the softmax.
    for out in (out_folded, out_parallel):
        assert out.shape == (B, Sq, d)
        err = jnp.max(jnp.abs(out - ref))
        assert jnp.allclose(out, ref, atol=5e-3, rtol=5e-3), f"max abs err = {err}"

    print("KERNEL_OK")
</pallas_src>

<mosaic_0001>
module attributes {stable_mosaic.version = 11 : i64} {
  func.func @mha_kernel(%arg0: i32, %arg1: memref<16x32xf32, #tpu.memory_space<vmem>>, %arg2: memref<16x32xf32, #tpu.memory_space<vmem>>, %arg3: memref<32x32xf32, #tpu.memory_space<vmem>>, %arg4: memref<1x32xf32, #tpu.memory_space<vmem>>, %arg5: memref<32x64xf32, #tpu.memory_space<vmem>>, %arg6: memref<1x64xf32, #tpu.memory_space<vmem>>, %arg7: memref<32x32xf32, #tpu.memory_space<vmem>>, %arg8: memref<1x32xf32, #tpu.memory_space<vmem>>, %arg9: memref<16x32xf32, #tpu.memory_space<vmem>>) attributes {dimension_semantics = [#tpu.dimension_semantics<parallel>], iteration_bounds = array<i64: 1>, scalar_prefetch = 0 : i64, scratch_operands = 0 : i64, tpu.core_type = #tpu.core_type<tc>, window_params = [{transform_indices = @transform_0, window_bounds = array<i64: 16, 32>}, {transform_indices = @transform_1, window_bounds = array<i64: 16, 32>}, {pipeline_mode = #tpu.pipeline_mode<synchronous>, transform_indices = @transform_2, window_bounds = array<i64: 32, 32>}, {pipeline_mode = #tpu.pipeline_mode<synchronous>, transform_indices = @transform_3, window_bounds = array<i64: 1, 32>}, {pipeline_mode = #tpu.pipeline_mode<synchronous>, transform_indices = @transform_4, window_bounds = array<i64: 32, 64>}, {pipeline_mode = #tpu.pipeline_mode<synchronous>, transform_indices = @transform_5, window_bounds = array<i64: 1, 64>}, {pipeline_mode = #tpu.pipeline_mode<synchronous>, transform_indices = @transform_6, window_bounds = array<i64: 32, 32>}, {pipeline_mode = #tpu.pipeline_mode<synchronous>, transform_indices = @transform_7, window_bounds = array<i64: 1, 32>}, {transform_indices = @transform_8, window_bounds = array<i64: 16, 32>}]} {
    %c0 = arith.constant 0 : index
    %c0_0 = arith.constant 0 : index
    %0 = vector.load %arg1[%c0, %c0_0] : memref<16x32xf32, #tpu.memory_space<vmem>>, vector<16x32xf32>
    %c0_1 = arith.constant 0 : index
    %c0_2 = arith.constant 0 : index
    %1 = vector.load %arg3[%c0_1, %c0_2] : memref<32x32xf32, #tpu.memory_space<vmem>>, vector<32x32xf32>
    %cst = arith.constant dense<0.000000e+00> : vector<16x32xf32>
    %2 = tpu.matmul %0, %1, %cst {dimension_numbers = #tpu.dot_dimension_numbers<[1], [0], [0], [1], [0, 0, 1, 1], [], []>} : vector<16x32xf32>, vector<32x32xf32>, vector<16x32xf32> -> vector<16x32xf32>
    %c0_3 = arith.constant 0 : index
    %c0_4 = arith.constant 0 : index
    %3 = vector.load %arg4[%c0_3, %c0_4] : memref<1x32xf32, #tpu.memory_space<vmem>>, vector<1x32xf32>
    %4 = vector.shape_cast %3 : vector<1x32xf32> to vector<32xf32>
    %5 = vector.shape_cast %4 : vector<32xf32> to vector<1x32xf32>
    %6 = vector.broadcast %5 : vector<1x32xf32> to vector<16x32xf32>
    %7 = arith.addf %2, %6 : vector<16x32xf32>
    %c0_5 = arith.constant 0 : index
    %c0_6 = arith.constant 0 : index
    %8 = vector.load %arg2[%c0_5, %c0_6] : memref<16x32xf32, #tpu.memory_space<vmem>>, vector<16x32xf32>
    %c0_7 = arith.constant 0 : index
    %c0_8 = arith.constant 0 : index
    %9 = vector.load %arg5[%c0_7, %c0_8] : memref<32x64xf32, #tpu.memory_space<vmem>>, vector<32x64xf32>
    %cst_9 = arith.constant dense<0.000000e+00> : vector<16x64xf32>
    %10 = tpu.matmul %8, %9, %cst_9 {dimension_numbers = #tpu.dot_dimension_numbers<[1], [0], [0], [1], [0, 0, 1, 1], [], []>} : vector<16x32xf32>, vector<32x64xf32>, vector<16x64xf32> -> vector<16x64xf32>
    %c0_10 = arith.constant 0 : index
    %c0_11 = arith.constant 0 : index
    %11 = vector.load %arg6[%c0_10, %c0_11] : memref<1x64xf32, #tpu.memory_space<vmem>>, vector<1x64xf32>
    %12 = vector.shape_cast %11 : vector<1x64xf32> to vector<64xf32>
    %13 = vector.shape_cast %12 : vector<64xf32> to vector<1x64xf32>
    %14 = vector.broadcast %13 : vector<1x64xf32> to vector<16x64xf32>
    %15 = arith.addf %10, %14 : vector<16x64xf32>
    %16 = vector.extract_strided_slice %15 {offsets = [0, 0], sizes = [16, 32], strides = [1, 1]} : vector<16x64xf32> to vector<16x32xf32>
    %17 = vector.extract_strided_slice %15 {offsets = [0, 32], sizes = [16, 32], strides = [1, 1]} : vector<16x64xf32> to vector<16x32xf32>
    %18 = vector.extract_strided_slice %7 {offsets = [0, 0], sizes = [8, 32], strides = [1, 1]} : vector<16x32xf32> to vector<8x32xf32>
    %19 = vector.extract_strided_slice %16 {offsets = [0, 0], sizes = [8, 32], strides = [1, 1]} : vector<16x32xf32> to vector<8x32xf32>
    %20 = vector.extract_strided_slice %17 {offsets = [0, 0], sizes = [8, 32], strides = [1, 1]} : vector<16x32xf32> to vector<8x32xf32>
    %21 = vector.extract_strided_slice %18 {offsets = [0, 0], sizes = [8, 8], strides = [1, 1]} : vector<8x32xf32> to vector<8x8xf32>
    %22 = vector.extract_strided_slice %19 {offsets = [0, 0], sizes = [8, 8], strides = [1, 1]} : vector<8x32xf32> to vector<8x8xf32>
    %cst_12 = arith.constant dense<0.000000e+00> : vector<8x8xf32>
    %23 = tpu.matmul %21, %22, %cst_12 {dimension_numbers = #tpu.dot_dimension_numbers<[1], [1], [0], [0], [0, 0, 1, 0], [], []>} : vector<8x8xf32>, vector<8x8xf32>, vector<8x8xf32> -> vector<8x8xf32>
    %cst_13 = arith.constant dense<0xFF800000> : vector<8xf32>
    %24 = vector.multi_reduction <maximumf>, %23, %cst_13 [1] : vector<8x8xf32> to vector<8xf32>
    %25 = vector.shape_cast %24 : vector<8xf32> to vector<8x1xf32>
    %26 = vector.broadcast %25 : vector<8x1xf32> to vector<8x8xf32>
    %27 = arith.subf %23, %26 : vector<8x8xf32>
    %28 = math.exp %27 : vector<8x8xf32>
    %cst_14 = arith.constant dense<0.000000e+00> : vector<8xf32>
    %29 = vector.multi_reduction <add>, %28, %cst_14 [1] : vector<8x8xf32> to vector<8xf32>
    %30 = vector.shape_cast %29 : vector<8xf32> to vector<8x1xf32>
    %31 = tpu.reciprocal %30 {approx = true} : vector<8x1xf32> -> vector<8x1xf32>
    %32 = vector.broadcast %31 : vector<8x1xf32> to vector<8x8xf32>
    %33 = arith.mulf %28, %32 : vector<8x8xf32>
    %34 = vector.extract_strided_slice %20 {offsets = [0, 0], sizes = [8, 8], strides = [1, 1]} : vector<8x32xf32> to vector<8x8xf32>
    %cst_15 = arith.constant dense<0.000000e+00> : vector<8x8xf32>
    %35 = tpu.matmul %33, %34, %cst_15 {dimension_numbers = #tpu.dot_dimension_numbers<[1], [0], [0], [1], [0, 0, 1, 1], [], []>} : vector<8x8xf32>, vector<8x8xf32>, vector<8x8xf32> -> vector<8x8xf32>
    %36 = vector.extract_strided_slice %18 {offsets = [0, 8], sizes = [8, 8], strides = [1, 1]} : vector<8x32xf32> to vector<8x8xf32>
    %37 = vector.extract_strided_slice %19 {offsets = [0, 8], sizes = [8, 8], strides = [1, 1]} : vector<8x32xf32> to vector<8x8xf32>
    %cst_16 = arith.constant dense<0.000000e+00> : vector<8x8xf32>
    %38 = tpu.matmul %36, %37, %cst_16 {dimension_numbers = #tpu.dot_dimension_numbers<[1], [1], [0], [0], [0, 0, 1, 0], [], []>} : vector<8x8xf32>, vector<8x8xf32>, vector<8x8xf32> -> vector<8x8xf32>
    %cst_17 = arith.constant dense<0xFF800000> : vector<8xf32>
    %39 = vector.multi_reduction <maximumf>, %38, %cst_17 [1] : vector<8x8xf32> to vector<8xf32>
    %40 = vector.shape_cast %39 : vector<8xf32> to vector<8x1xf32>
    %41 = vector.broadcast %40 : vector<8x1xf32> to vector<8x8xf32>
    %42 = arith.subf %38, %41 : vector<8x8xf32>
    %43 = math.exp %42 : vector<8x8xf32>
    %cst_18 = arith.constant dense<0.000000e+00> : vector<8xf32>
    %44 = vector.multi_reduction <add>, %43, %cst_18 [1] : vector<8x8xf32> to vector<8xf32>
    %45 = vector.shape_cast %44 : vector<8xf32> to vector<8x1xf32>
    %46 = tpu.reciprocal %45 {approx = true} : vector<8x1xf32> -> vector<8x1xf32>
    %47 = vector.broadcast %46 : vector<8x1xf32> to vector<8x8xf32>
    %48 = arith.mulf %43, %47 : vector<8x8xf32>
    %49 = vector.extract_strided_slice %20 {offsets = [0, 8], sizes = [8, 8], strides = [1, 1]} : vector<8x32xf32> to vector<8x8xf32>
    %cst_19 = arith.constant dense<0.000000e+00> : vector<8x8xf32>
    %50 = tpu.matmul %48, %49, %cst_19 {dimension_numbers = #tpu.dot_dimension_numbers<[1], [0], [0], [1], [0, 0, 1, 1], [], []>} : vector<8x8xf32>, vector<8x8xf32>, vector<8x8xf32> -> vector<8x8xf32>
    %51 = vector.extract_strided_slice %18 {offsets = [0, 16], sizes = [8, 8], strides = [1, 1]} : vector<8x32xf32> to vector<8x8xf32>
    %52 = vector.extract_strided_slice %19 {offsets = [0, 16], sizes = [8, 8], strides = [1, 1]} : vector<8x32xf32> to vector<8x8xf32>
    %cst_20 = arith.constant dense<0.000000e+00> : vector<8x8xf32>
    %53 = tpu.matmul %51, %52, %cst_20 {dimension_numbers = #tpu.dot_dimension_numbers<[1], [1], [0], [0], [0, 0, 1, 0], [], []>} : vector<8x8xf32>, vector<8x8xf32>, vector<8x8xf32> -> vector<8x8xf32>
    %cst_21 = arith.constant dense<0xFF800000> : vector<8xf32>
    %54 = vector.multi_reduction <maximumf>, %53, %cst_21 [1] : vector<8x8xf32> to vector<8xf32>
    %55 = vector.shape_cast %54 : vector<8xf32> to vector<8x1xf32>
    %56 = vector.broadcast %55 : vector<8x1xf32> to vector<8x8xf32>
    %57 = arith.subf %53, %56 : vector<8x8xf32>
    %58 = math.exp %57 : vector<8x8xf32>
    %cst_22 = arith.constant dense<0.000000e+00> : vector<8xf32>
    %59 = vector.multi_reduction <add>, %58, %cst_22 [1] : vector<8x8xf32> to vector<8xf32>
    %60 = vector.shape_cast %59 : vector<8xf32> to vector<8x1xf32>
    %61 = tpu.reciprocal %60 {approx = true} : vector<8x1xf32> -> vector<8x1xf32>
    %62 = vector.broadcast %61 : vector<8x1xf32> to vector<8x8xf32>
    %63 = arith.mulf %58, %62 : vector<8x8xf32>
    %64 = vector.extract_strided_slice %20 {offsets = [0, 16], sizes = [8, 8], strides = [1, 1]} : vector<8x32xf32> to vector<8x8xf32>
    %cst_23 = arith.constant dense<0.000000e+00> : vector<8x8xf32>
    %65 = tpu.matmul %63, %64, %cst_23 {dimension_numbers = #tpu.dot_dimension_numbers<[1], [0], [0], [1], [0, 0, 1, 1], [], []>} : vector<8x8xf32>, vector<8x8xf32>, vector<8x8xf32> -> vector<8x8xf32>
    %66 = vector.extract_strided_slice %18 {offsets = [0, 24], sizes = [8, 8], strides = [1, 1]} : vector<8x32xf32> to vector<8x8xf32>
    %67 = vector.extract_strided_slice %19 {offsets = [0, 24], sizes = [8, 8], strides = [1, 1]} : vector<8x32xf32> to vector<8x8xf32>
    %cst_24 = arith.constant dense<0.000000e+00> : vector<8x8xf32>
    %68 = tpu.matmul %66, %67, %cst_24 {dimension_numbers = #tpu.dot_dimension_numbers<[1], [1], [0], [0], [0, 0, 1, 0], [], []>} : vector<8x8xf32>, vector<8x8xf32>, vector<8x8xf32> -> vector<8x8xf32>
    %cst_25 = arith.constant dense<0xFF800000> : vector<8xf32>
    %69 = vector.multi_reduction <maximumf>, %68, %cst_25 [1] : vector<8x8xf32> to vector<8xf32>
    %70 = vector.shape_cast %69 : vector<8xf32> to vector<8x1xf32>
    %71 = vector.broadcast %70 : vector<8x1xf32> to vector<8x8xf32>
    %72 = arith.subf %68, %71 : vector<8x8xf32>
    %73 = math.exp %72 : vector<8x8xf32>
    %cst_26 = arith.constant dense<0.000000e+00> : vector<8xf32>
    %74 = vector.multi_reduction <add>, %73, %cst_26 [1] : vector<8x8xf32> to vector<8xf32>
    %75 = vector.shape_cast %74 : vector<8xf32> to vector<8x1xf32>
    %76 = tpu.reciprocal %75 {approx = true} : vector<8x1xf32> -> vector<8x1xf32>
    %77 = vector.broadcast %76 : vector<8x1xf32> to vector<8x8xf32>
    %78 = arith.mulf %73, %77 : vector<8x8xf32>
    %79 = vector.extract_strided_slice %20 {offsets = [0, 24], sizes = [8, 8], strides = [1, 1]} : vector<8x32xf32> to vector<8x8xf32>
    %cst_27 = arith.constant dense<0.000000e+00> : vector<8x8xf32>
    %80 = tpu.matmul %78, %79, %cst_27 {dimension_numbers = #tpu.dot_dimension_numbers<[1], [0], [0], [1], [0, 0, 1, 1], [], []>} : vector<8x8xf32>, vector<8x8xf32>, vector<8x8xf32> -> vector<8x8xf32>
    %81 = tpu.concatenate %35, %50, %65, %80 in 1 : vector<8x8xf32>, vector<8x8xf32>, vector<8x8xf32>, vector<8x8xf32> -> vector<8x32xf32>
    %82 = vector.extract_strided_slice %7 {offsets = [8, 0], sizes = [8, 32], strides = [1, 1]} : vector<16x32xf32> to vector<8x32xf32>
    %83 = vector.extract_strided_slice %16 {offsets = [8, 0], sizes = [8, 32], strides = [1, 1]} : vector<16x32xf32> to vector<8x32xf32>
    %84 = vector.extract_strided_slice %17 {offsets = [8, 0], sizes = [8, 32], strides = [1, 1]} : vector<16x32xf32> to vector<8x32xf32>
    %85 = vector.extract_strided_slice %82 {offsets = [0, 0], sizes = [8, 8], strides = [1, 1]} : vector<8x32xf32> to vector<8x8xf32>
    %86 = vector.extract_strided_slice %83 {offsets = [0, 0], sizes = [8, 8], strides = [1, 1]} : vector<8x32xf32> to vector<8x8xf32>
    %cst_28 = arith.constant dense<0.000000e+00> : vector<8x8xf32>
    %87 = tpu.matmul %85, %86, %cst_28 {dimension_numbers = #tpu.dot_dimension_numbers<[1], [1], [0], [0], [0, 0, 1, 0], [], []>} : vector<8x8xf32>, vector<8x8xf32>, vector<8x8xf32> -> vector<8x8xf32>
    %cst_29 = arith.constant dense<0xFF800000> : vector<8xf32>
    %88 = vector.multi_reduction <maximumf>, %87, %cst_29 [1] : vector<8x8xf32> to vector<8xf32>
    %89 = vector.shape_cast %88 : vector<8xf32> to vector<8x1xf32>
    %90 = vector.broadcast %89 : vector<8x1xf32> to vector<8x8xf32>
    %91 = arith.subf %87, %90 : vector<8x8xf32>
    %92 = math.exp %91 : vector<8x8xf32>
    %cst_30 = arith.constant dense<0.000000e+00> : vector<8xf32>
    %93 = vector.multi_reduction <add>, %92, %cst_30 [1] : vector<8x8xf32> to vector<8xf32>
    %94 = vector.shape_cast %93 : vector<8xf32> to vector<8x1xf32>
    %95 = tpu.reciprocal %94 {approx = true} : vector<8x1xf32> -> vector<8x1xf32>
    %96 = vector.broadcast %95 : vector<8x1xf32> to vector<8x8xf32>
    %97 = arith.mulf %92, %96 : vector<8x8xf32>
    %98 = vector.extract_strided_slice %84 {offsets = [0, 0], sizes = [8, 8], strides = [1, 1]} : vector<8x32xf32> to vector<8x8xf32>
    %cst_31 = arith.constant dense<0.000000e+00> : vector<8x8xf32>
    %99 = tpu.matmul %97, %98, %cst_31 {dimension_numbers = #tpu.dot_dimension_numbers<[1], [0], [0], [1], [0, 0, 1, 1], [], []>} : vector<8x8xf32>, vector<8x8xf32>, vector<8x8xf32> -> vector<8x8xf32>
    %100 = vector.extract_strided_slice %82 {offsets = [0, 8], sizes = [8, 8], strides = [1, 1]} : vector<8x32xf32> to vector<8x8xf32>
    %101 = vector.extract_strided_slice %83 {offsets = [0, 8], sizes = [8, 8], strides = [1, 1]} : vector<8x32xf32> to vector<8x8xf32>
    %cst_32 = arith.constant dense<0.000000e+00> : vector<8x8xf32>
    %102 = tpu.matmul %100, %101, %cst_32 {dimension_numbers = #tpu.dot_dimension_numbers<[1], [1], [0], [0], [0, 0, 1, 0], [], []>} : vector<8x8xf32>, vector<8x8xf32>, vector<8x8xf32> -> vector<8x8xf32>
    %cst_33 = arith.constant dense<0xFF800000> : vector<8xf32>
    %103 = vector.multi_reduction <maximumf>, %102, %cst_33 [1] : vector<8x8xf32> to vector<8xf32>
    %104 = vector.shape_cast %103 : vector<8xf32> to vector<8x1xf32>
    %105 = vector.broadcast %104 : vector<8x1xf32> to vector<8x8xf32>
    %106 = arith.subf %102, %105 : vector<8x8xf32>
    %107 = math.exp %106 : vector<8x8xf32>
    %cst_34 = arith.constant dense<0.000000e+00> : vector<8xf32>
    %108 = vector.multi_reduction <add>, %107, %cst_34 [1] : vector<8x8xf32> to vector<8xf32>
    %109 = vector.shape_cast %108 : vector<8xf32> to vector<8x1xf32>
    %110 = tpu.reciprocal %109 {approx = true} : vector<8x1xf32> -> vector<8x1xf32>
    %111 = vector.broadcast %110 : vector<8x1xf32> to vector<8x8xf32>
    %112 = arith.mulf %107, %111 : vector<8x8xf32>
    %113 = vector.extract_strided_slice %84 {offsets = [0, 8], sizes = [8, 8], strides = [1, 1]} : vector<8x32xf32> to vector<8x8xf32>
    %cst_35 = arith.constant dense<0.000000e+00> : vector<8x8xf32>
    %114 = tpu.matmul %112, %113, %cst_35 {dimension_numbers = #tpu.dot_dimension_numbers<[1], [0], [0], [1], [0, 0, 1, 1], [], []>} : vector<8x8xf32>, vector<8x8xf32>, vector<8x8xf32> -> vector<8x8xf32>
    %115 = vector.extract_strided_slice %82 {offsets = [0, 16], sizes = [8, 8], strides = [1, 1]} : vector<8x32xf32> to vector<8x8xf32>
    %116 = vector.extract_strided_slice %83 {offsets = [0, 16], sizes = [8, 8], strides = [1, 1]} : vector<8x32xf32> to vector<8x8xf32>
    %cst_36 = arith.constant dense<0.000000e+00> : vector<8x8xf32>
    %117 = tpu.matmul %115, %116, %cst_36 {dimension_numbers = #tpu.dot_dimension_numbers<[1], [1], [0], [0], [0, 0, 1, 0], [], []>} : vector<8x8xf32>, vector<8x8xf32>, vector<8x8xf32> -> vector<8x8xf32>
    %cst_37 = arith.constant dense<0xFF800000> : vector<8xf32>
    %118 = vector.multi_reduction <maximumf>, %117, %cst_37 [1] : vector<8x8xf32> to vector<8xf32>
    %119 = vector.shape_cast %118 : vector<8xf32> to vector<8x1xf32>
    %120 = vector.broadcast %119 : vector<8x1xf32> to vector<8x8xf32>
    %121 = arith.subf %117, %120 : vector<8x8xf32>
    %122 = math.exp %121 : vector<8x8xf32>
    %cst_38 = arith.constant dense<0.000000e+00> : vector<8xf32>
    %123 = vector.multi_reduction <add>, %122, %cst_38 [1] : vector<8x8xf32> to vector<8xf32>
    %124 = vector.shape_cast %123 : vector<8xf32> to vector<8x1xf32>
    %125 = tpu.reciprocal %124 {approx = true} : vector<8x1xf32> -> vector<8x1xf32>
    %126 = vector.broadcast %125 : vector<8x1xf32> to vector<8x8xf32>
    %127 = arith.mulf %122, %126 : vector<8x8xf32>
    %128 = vector.extract_strided_slice %84 {offsets = [0, 16], sizes = [8, 8], strides = [1, 1]} : vector<8x32xf32> to vector<8x8xf32>
    %cst_39 = arith.constant dense<0.000000e+00> : vector<8x8xf32>
    %129 = tpu.matmul %127, %128, %cst_39 {dimension_numbers = #tpu.dot_dimension_numbers<[1], [0], [0], [1], [0, 0, 1, 1], [], []>} : vector<8x8xf32>, vector<8x8xf32>, vector<8x8xf32> -> vector<8x8xf32>
    %130 = vector.extract_strided_slice %82 {offsets = [0, 24], sizes = [8, 8], strides = [1, 1]} : vector<8x32xf32> to vector<8x8xf32>
    %131 = vector.extract_strided_slice %83 {offsets = [0, 24], sizes = [8, 8], strides = [1, 1]} : vector<8x32xf32> to vector<8x8xf32>
    %cst_40 = arith.constant dense<0.000000e+00> : vector<8x8xf32>
    %132 = tpu.matmul %130, %131, %cst_40 {dimension_numbers = #tpu.dot_dimension_numbers<[1], [1], [0], [0], [0, 0, 1, 0], [], []>} : vector<8x8xf32>, vector<8x8xf32>, vector<8x8xf32> -> vector<8x8xf32>
    %cst_41 = arith.constant dense<0xFF800000> : vector<8xf32>
    %133 = vector.multi_reduction <maximumf>, %132, %cst_41 [1] : vector<8x8xf32> to vector<8xf32>
    %134 = vector.shape_cast %133 : vector<8xf32> to vector<8x1xf32>
    %135 = vector.broadcast %134 : vector<8x1xf32> to vector<8x8xf32>
    %136 = arith.subf %132, %135 : vector<8x8xf32>
    %137 = math.exp %136 : vector<8x8xf32>
    %cst_42 = arith.constant dense<0.000000e+00> : vector<8xf32>
    %138 = vector.multi_reduction <add>, %137, %cst_42 [1] : vector<8x8xf32> to vector<8xf32>
    %139 = vector.shape_cast %138 : vector<8xf32> to vector<8x1xf32>
    %140 = tpu.reciprocal %139 {approx = true} : vector<8x1xf32> -> vector<8x1xf32>
    %141 = vector.broadcast %140 : vector<8x1xf32> to vector<8x8xf32>
    %142 = arith.mulf %137, %141 : vector<8x8xf32>
    %143 = vector.extract_strided_slice %84 {offsets = [0, 24], sizes = [8, 8], strides = [1, 1]} : vector<8x32xf32> to vector<8x8xf32>
    %cst_43 = arith.constant dense<0.000000e+00> : vector<8x8xf32>
    %144 = tpu.matmul %142, %143, %cst_43 {dimension_numbers = #tpu.dot_dimension_numbers<[1], [0], [0], [1], [0, 0, 1, 1], [], []>} : vector<8x8xf32>, vector<8x8xf32>, vector<8x8xf32> -> vector<8x8xf32>
    %145 = tpu.concatenate %99, %114, %129, %144 in 1 : vector<8x8xf32>, vector<8x8xf32>, vector<8x8xf32>, vector<8x8xf32> -> vector<8x32xf32>
    %146 = tpu.concatenate %81, %145 in 0 : vector<8x32xf32>, vector<8x32xf32> -> vector<16x32xf32>
    %c0_44 = arith.constant 0 : index
    %c0_45 = arith.constant 0 : index
    %147 = vector.load %arg7[%c0_44, %c0_45] : memref<32x32xf32, #tpu.memory_space<vmem>>, vector<32x32xf32>
    %cst_46 = arith.constant dense<0.000000e+00> : vector<16x32xf32>
    %148 = tpu.matmul %146, %147, %cst_46 {dimension_numbers = #tpu.dot_dimension_numbers<[1], [0], [0], [1], [0, 0, 1, 1], [], []>} : vector<16x32xf32>, vector<32x32xf32>, vector<16x32xf32> -> vector<16x32xf32>
    %c0_47 = arith.constant 0 : index
    %c0_48 = arith.constant 0 : index
    %149 = vector.load %arg8[%c0_47, %c0_48] : memref<1x32xf32, #tpu.memory_space<vmem>>, vector<1x32xf32>
    %150 = vector.shape_cast %149 : vector<1x32xf32> to vector<32xf32>
    %151 = vector.shape_cast %150 : vector<32xf32> to vector<1x32xf32>
    %152 = vector.broadcast %151 : vector<1x32xf32> to vector<16x32xf32>
    %153 = arith.addf %148, %152 : vector<16x32xf32>
    %c0_49 = arith.constant 0 : index
    %c0_50 = arith.constant 0 : index
    %154 = vector.load %arg9[%c0_49, %c0_50] : memref<16x32xf32, #tpu.memory_space<vmem>>, vector<16x32xf32>
    tpu.vector_store %arg9[%c0_49, %c0_50], %153 {strides = array<i32>} : memref<16x32xf32, #tpu.memory_space<vmem>>, vector<16x32xf32>,
    return
  }
  func.func @transform_0(%arg0: i32) -> (i32, i32) {
    %c0_i32 = arith.constant 0 : i32
    %c0_i32_0 = arith.constant 0 : i32
    return %arg0, %c0_i32 : i32, i32
  }
  func.func @transform_1(%arg0: i32) -> (i32, i32) {
    %c0_i32 = arith.constant 0 : i32
    %c0_i32_0 = arith.constant 0 : i32
    return %arg0, %c0_i32 : i32, i32
  }
  func.func @transform_2(%arg0: i32) -> (i32, i32) {
    %c0_i32 = arith.constant 0 : i32
    %c0_i32_0 = arith.constant 0 : i32
    %c0_i32_1 = arith.constant 0 : i32
    return %c0_i32, %c0_i32_0 : i32, i32
  }
  func.func @transform_3(%arg0: i32) -> (i32, i32) {
    %c0_i32 = arith.constant 0 : i32
    %c0_i32_0 = arith.constant 0 : i32
    %c0_i32_1 = arith.constant 0 : i32
    return %c0_i32, %c0_i32_0 : i32, i32
  }
  func.func @transform_4(%arg0: i32) -> (i32, i32) {
    %c0_i32 = arith.constant 0 : i32
    %c0_i32_0 = arith.constant 0 : i32
    %c0_i32_1 = arith.constant 0 : i32
    return %c0_i32, %c0_i32_0 : i32, i32
  }
  func.func @transform_5(%arg0: i32) -> (i32, i32) {
    %c0_i32 = arith.constant 0 : i32
    %c0_i32_0 = arith.constant 0 : i32
    %c0_i32_1 = arith.constant 0 : i32
    return %c0_i32, %c0_i32_0 : i32, i32
  }
  func.func @transform_6(%arg0: i32) -> (i32, i32) {
    %c0_i32 = arith.constant 0 : i32
    %c0_i32_0 = arith.constant 0 : i32
    %c0_i32_1 = arith.constant 0 : i32
    return %c0_i32, %c0_i32_0 : i32, i32
  }
  func.func @transform_7(%arg0: i32) -> (i32, i32) {
    %c0_i32 = arith.constant 0 : i32
    %c0_i32_0 = arith.constant 0 : i32
    %c0_i32_1 = arith.constant 0 : i32
    return %c0_i32, %c0_i32_0 : i32, i32
  }
  func.func @transform_8(%arg0: i32) -> (i32, i32) {
    %c0_i32 = arith.constant 0 : i32
    %c0_i32_0 = arith.constant 0 : i32
    return %arg0, %c0_i32 : i32, i32
  }
}

</mosaic_0001>

<llo_original>
// kernel: tpu_custom_call.1
$region0: #{tpu_custom_call.1}
  #allocation0 [shape = 'u32[]', space=smem, size = 0x4, offset = 0x4, fixed_abs, tag = 'smem constant byte address 0x4 - core index']
  #allocation1 [shape = 'u32[144,128]{1,0:T(1,128)}', space=vmem, size = 0x12000, scoped, tag = 'internal scratch']
  %s0 = inlined_call_operand.hbm [shape: f32[16,32], index: 0, kind: input, shape index: {}]
  %s1 = inlined_call_operand.hbm [shape: f32[16,32], index: 1, kind: input, shape index: {}]
  %s2 = inlined_call_operand.hbm [shape: f32[32,32], index: 2, kind: input, shape index: {}]
  %s3 = inlined_call_operand.vmem [shape: f32[1,32], index: 3, kind: input, shape index: {}]
  %s4 = inlined_call_operand.hbm [shape: f32[32,64], index: 4, kind: input, shape index: {}]
  %s5 = inlined_call_operand.vmem [shape: f32[1,64], index: 5, kind: input, shape index: {}]
  %s6 = inlined_call_operand.hbm [shape: f32[32,32], index: 6, kind: input, shape index: {}]
  %s7 = inlined_call_operand.vmem [shape: f32[1,32], index: 7, kind: input, shape index: {}]
  %s8 = inlined_call_operand.hbm [shape: f32[16,32], index: 8, kind: output, shape index: {}]
  %s9 = sld [smem:[#allocation0]]
  $region62: #{tpu_custom_call.1} parent=0
    _
  %s11 = ssub.s32 1, %s9
  %s12 = scalar_select 0, %s11, %s9
  $region1: #{tpu_custom_call.1} parent=0
    #allocation2 [shape = 'u8[8192]{0}', space=vmem, size = 0x2000, scoped, tag = 'input window, operand 0, single buffered']
    #allocation3 [shape = 's32[1]{0}', space=sflag, size = 0x4, scoped, tag = 'scoped memory for tpu_custom_call.1']
    #allocation4 [shape = 's32[1]{0}', space=sflag, size = 0x4, scoped, tag = 'scoped memory for tpu_custom_call.1']
    #allocation5 [shape = 'u8[8192]{0}', space=vmem, size = 0x2000, scoped, tag = 'input window, operand 1, single buffered']
    #allocation6 [shape = 's32[1]{0}', space=sflag, size = 0x4, scoped, tag = 'scoped memory for tpu_custom_call.1']
    #allocation7 [shape = 'u8[16384]{0}', space=vmem, size = 0x4000, scoped, tag = 'input window, operand 2, single buffered']
    #allocation8 [shape = 'u8[16384]{0}', space=vmem, size = 0x4000, scoped, tag = 'input window, operand 4, single buffered']
    #allocation9 [shape = 's32[1]{0}', space=sflag, size = 0x4, scoped, tag = 'scoped memory for tpu_custom_call.1']
    #allocation10 [shape = 'u8[16384]{0}', space=vmem, size = 0x4000, scoped, tag = 'input window, operand 6, single buffered']
    #allocation11 [shape = 'u8[8192]{0}', space=vmem, size = 0x2000, scoped, tag = 'output window, operand 0, single buffered']
    %13 = vsyncpa [#allocation3], 0
    %14 = vsyncpa [#allocation6], 0
    %15 = vsyncpa [#allocation9], 0
    %16 = vsyncpa [#allocation4], 0
    // Predicated region
    $region2: #{tpu_custom_call.1} parent=1 // pred_check
      _
    $region3: #{tpu_custom_call.1} parent=1 // pred_check_branch
      %18 = sbr.rel (0) target = $region5
    $region4: #{tpu_custom_call.1} parent=1 // pred_region
      %s20 = ssub.s32 256, 256
      %21 = vsyncadd [#allocation3], %s20
      %s22 = sshll.u32 [#allocation2], 4
      %s23 = int_to_ptr.vmem [resolvable:$true] %s22
      %28 = dma.hbm_to_vmem [thread:$0]  %s0, 256, %s23, [#allocation3], 128, 128, 8
    $region5: #{tpu_custom_call.1} parent=1 // pred_fallthru
      _
    // Predicated region
    $region6: #{tpu_custom_call.1} parent=1 // pred_check
      _
    $region7: #{tpu_custom_call.1} parent=1 // pred_check_branch
      %30 = sbr.rel (0) target = $region9
    $region8: #{tpu_custom_call.1} parent=1 // pred_region
      %s32 = ssub.s32 256, 256
      %33 = vsyncadd [#allocation6], %s32
      %s34 = sshll.u32 [#allocation5], 4
      %s35 = int_to_ptr.vmem [resolvable:$true] %s34
      %40 = dma.hbm_to_vmem [thread:$0]  %s1, 256, %s35, [#allocation6], 128, 128, 8
    $region9: #{tpu_custom_call.1} parent=1 // pred_fallthru
      _
    // Predicated region
    $region10: #{tpu_custom_call.1} parent=1 // pred_check
      _
    $region11: #{tpu_custom_call.1} parent=1 // pred_check_branch
      %42 = sbr.rel (0) target = $region13
    $region12: #{tpu_custom_call.1} parent=1 // pred_region
      %s44 = ssub.s32 512, 512
      %45 = vsyncadd [#allocation6], %s44
      %s46 = sshll.u32 [#allocation7], 4
      %s47 = int_to_ptr.vmem [resolvable:$true] %s46
      %52 = dma.hbm_to_vmem [thread:$0]  %s2, 512, %s47, [#allocation6], 128, 128, 8
    $region13: #{tpu_custom_call.1} parent=1 // pred_fallthru
      _
    // Predicated region
    $region14: #{tpu_custom_call.1} parent=1 // pred_check
      _
    $region15: #{tpu_custom_call.1} parent=1 // pred_check_branch
      %54 = sbr.rel (0) target = $region17
    $region16: #{tpu_custom_call.1} parent=1 // pred_region
      _
    $region17: #{tpu_custom_call.1} parent=1 // pred_fallthru
      _
    // Predicated region
    $region18: #{tpu_custom_call.1} parent=1 // pred_check
      _
    $region19: #{tpu_custom_call.1} parent=1 // pred_check_branch
      %56 = sbr.rel (0) target = $region21
    $region20: #{tpu_custom_call.1} parent=1 // pred_region
      %s58 = ssub.s32 512, 512
      %59 = vsyncadd [#allocation9], %s58
      %s60 = sshll.u32 [#allocation8], 4
      %s61 = int_to_ptr.vmem [resolvable:$true] %s60
      %66 = dma.hbm_to_vmem [thread:$0]  %s4, 512, %s61, [#allocation9], 128, 128, 8
    $region21: #{tpu_custom_call.1} parent=1 // pred_fallthru
      _
    // Predicated region
    $region22: #{tpu_custom_call.1} parent=1 // pred_check
      _
    $region23: #{tpu_custom_call.1} parent=1 // pred_check_branch
      %68 = sbr.rel (0) target = $region25
    $region24: #{tpu_custom_call.1} parent=1 // pred_region
      _
    $region25: #{tpu_custom_call.1} parent=1 // pred_fallthru
      _
    // Predicated region
    $region26: #{tpu_custom_call.1} parent=1 // pred_check
      _
    $region27: #{tpu_custom_call.1} parent=1 // pred_check_branch
      %70 = sbr.rel (0) target = $region29
    $region28: #{tpu_custom_call.1} parent=1 // pred_region
      %s72 = ssub.s32 512, 512
      %73 = vsyncadd [#allocation9], %s72
      %s74 = sshll.u32 [#allocation10], 4
      %s75 = int_to_ptr.vmem [resolvable:$true] %s74
      %80 = dma.hbm_to_vmem [thread:$0]  %s6, 512, %s75, [#allocation9], 128, 128, 8
    $region29: #{tpu_custom_call.1} parent=1 // pred_fallthru
      _
    // Predicated region
    $region30: #{tpu_custom_call.1} parent=1 // pred_check
      _
    $region31: #{tpu_custom_call.1} parent=1 // pred_check_branch
      %82 = sbr.rel (0) target = $region33
    $region32: #{tpu_custom_call.1} parent=1 // pred_region
      _
    $region33: #{tpu_custom_call.1} parent=1 // pred_fallthru
      _
    // Predicated region
    $region34: #{tpu_custom_call.1} parent=1 // pred_check
      _
    $region35: #{tpu_custom_call.1} parent=1 // pred_check_branch
      %84 = sbr.rel (0) target = $region37
    $region36: #{tpu_custom_call.1} parent=1 // pred_region
      %85 = dma.done [#allocation3], 256
    $region37: #{tpu_custom_call.1} parent=1 // pred_fallthru
      _
    // Predicated region
    $region38: #{tpu_custom_call.1} parent=1 // pred_check
      _
    $region39: #{tpu_custom_call.1} parent=1 // pred_check_branch
      %87 = sbr.rel (0) target = $region41
    $region40: #{tpu_custom_call.1} parent=1 // pred_region
      %88 = dma.done [#allocation6], 256
    $region41: #{tpu_custom_call.1} parent=1 // pred_fallthru
      _
    // Predicated region
    $region42: #{tpu_custom_call.1} parent=1 // pred_check
      _
    $region43: #{tpu_custom_call.1} parent=1 // pred_check_branch
      %90 = sbr.rel (0) target = $region45
    $region44: #{tpu_custom_call.1} parent=1 // pred_region
      %91 = dma.done [#allocation6], 512
    $region45: #{tpu_custom_call.1} parent=1 // pred_fallthru
      _
    // Predicated region
    $region46: #{tpu_custom_call.1} parent=1 // pred_check
      _
    $region47: #{tpu_custom_call.1} parent=1 // pred_check_branch
      %93 = sbr.rel (0) target = $region49
    $region48: #{tpu_custom_call.1} parent=1 // pred_region
      %94 = dma.done [#allocation9], 512
    $region49: #{tpu_custom_call.1} parent=1 // pred_fallthru
      _
    // Predicated region
    $region50: #{tpu_custom_call.1} parent=1 // pred_check
      _
    $region51: #{tpu_custom_call.1} parent=1 // pred_check_branch
      %96 = sbr.rel (0) target = $region53
    $region52: #{tpu_custom_call.1} parent=1 // pred_region
      %97 = dma.done [#allocation9], 512
    $region53: #{tpu_custom_call.1} parent=1 // pred_fallthru
      _
    %v98 = vld [vmem:[#allocation2] sm:$0xff]
    %v99 = vld [vmem:[#allocation2 + $0x8] sm:$0xff]
    %v100 = vld [vmem:[#allocation7] sm:$0xff]
    %v101 = vld [vmem:[#allocation7 + $0x8] sm:$0xff]
    %v102 = vld [vmem:[#allocation7 + $0x10] sm:$0xff]
    %v103 = vld [vmem:[#allocation7 + $0x18] sm:$0xff]
    %v104 = vld [vmem:[%s3] sm:$0x1]
    %v106 = vlaneseq
    %v107 = vshrl.u32 %v106, 7
    %v108 = vsub.s32 0, %v107
    %v109 = vrot.slane %v104, %v108
    %vm111 = vcmask 261120
    %v113 = vsel %vm111, %v98, 0
    %v116 = vsel %vm111, %v99, 0
    %118 = vmatprep.subr.mxu0 0.0
    %119 = vmatpush1.msra.mxu0 %v100
    %120 = vmatprep.subr.mxu0 0.0
    %121 = vmatpush1.msra.mxu0 %v101
    %122 = vmatprep.subr.mxu0 0.0
    %123 = vmatpush1.msra.mxu0 %v102
    %124 = vmatprep.subr.mxu0 0.0
    %125 = vmatpush1.msra.mxu0 %v103
    %126 = vmatprep.subr.mxu0 0.0
    %127 = vmatpush1.msra.mxu0 0.0
    %128 = vmatprep.subr.mxu0 0.0
    %129 = vmatpush1.msra.mxu0 0.0
    %130 = vmatprep.subr.mxu0 0.0
    %131 = vmatpush1.msra.mxu0 0.0
    %132 = vmatprep.subr.mxu0 0.0
    %133 = vmatpush1.msra.mxu0 0.0
    %134 = vmatprep.subr.mxu0 0.0
    %135 = vmatpush1.msra.mxu0 0.0
    %136 = vmatprep.subr.mxu0 0.0
    %137 = vmatpush1.msra.mxu0 0.0
    %138 = vmatprep.subr.mxu0 0.0
    %139 = vmatpush1.msra.mxu0 0.0
    %140 = vmatprep.subr.mxu0 0.0
    %141 = vmatpush1.msra.mxu0 0.0
    %142 = vmatprep.subr.mxu0 0.0
    %143 = vmatpush1.msra.mxu0 0.0
    %144 = vmatprep.subr.mxu0 0.0
    %145 = vmatpush1.msra.mxu0 0.0
    %146 = vmatprep.subr.mxu0 0.0
    %147 = vmatpush1.msra.mxu0 0.0
    %148 = vmatprep.subr.mxu0 0.0
    %149 = vmatpush1.msra.mxu0 0.0
    %150 = vmatprep.subr.mxu0 0.0
    %151 = vmatpush1.msra.mxu0 0.0
    %152 = vmatprep.subr.mxu0 0.0
    %153 = vmatpush1.msra.mxu0 0.0
    %154 = vmatprep.subr.mxu0 0.0
    %155 = vmatpush1.msra.mxu0 0.0
    %156 = vmatprep.subr.mxu0 0.0
    %157 = vmatpush1.msra.mxu0 0.0
    %158 = vmatprep.subr.mxu0 0.0
    %159 = vmatpush1.msra.mxu0 0.0
    %160 = vmatprep.subr.mxu0 0.0
    %161 = vmatpush1.msra.mxu0 0.0
    %162 = vmatprep.subr.mxu0 0.0
    %163 = vmatpush1.msra.mxu0 0.0
    %164 = vmatprep.subr.mxu0 0.0
    %165 = vmatpush1.msra.mxu0 0.0
    %166 = vmatprep.subr.mxu0 0.0
    %167 = vmatpush1.msra.mxu0 0.0
    %168 = vmatprep.subr.mxu0 0.0
    %169 = vmatpush1.msra.mxu0 0.0
    %170 = vmatprep.subr.mxu0 0.0
    %171 = vmatpush1.msra.mxu0 0.0
    %172 = vmatprep.subr.mxu0 0.0
    %173 = vmatpush1.msra.mxu0 0.0
    %174 = vmatprep.subr.mxu0 0.0
    %175 = vmatpush1.msra.mxu0 0.0
    %176 = vmatprep.subr.mxu0 0.0
    %177 = vmatpush1.msra.mxu0 0.0
    %178 = vmatprep.subr.mxu0 0.0
    %179 = vmatpush1.msra.mxu0 0.0
    %180 = vmatprep.subr.mxu0 0.0
    %181 = vmatpush1.msra.mxu0 0.0
    %182 = vmatprep.mubr.f32.mxu0 0.0
    %183 = vmatmul.mubr.f32.gmra.mrb[0].mxu0 %v113
    %v184 = vpop.f32.mrb[0].mxu0
    %v185 = vadd.f32 %v109, %v184
    %v186 = vpop.f32.mrb[0].mxu0
    %187 = vmatprep.mubr.f32.mxu0 0.0
    %188 = vmatmul.mubr.f32.gmra.mrb[0].mxu0 %v116
    %v189 = vpop.f32.mrb[0].mxu0
    %v190 = vadd.f32 %v109, %v189
    %v191 = vpop.f32.mrb[0].mxu0
    %192 = vdwg.mxu0
    %v193 = vld [vmem:[#allocation5] sm:$0xff]
    %v194 = vld [vmem:[#allocation5 + $0x8] sm:$0xff]
    %v195 = vld [vmem:[#allocation8] sm:$0xff]
    %v196 = vld [vmem:[#allocation8 + $0x8] sm:$0xff]
    %v197 = vld [vmem:[#allocation8 + $0x10] sm:$0xff]
    %v198 = vld [vmem:[#allocation8 + $0x18] sm:$0xff]
    %v199 = vld [vmem:[%s5] sm:$0x1]
    %v201 = vlaneseq
    %v202 = vshrl.u32 %v201, 7
    %v203 = vsub.s32 0, %v202
    %v204 = vrot.slane %v199, %v203
    %v207 = vsel %vm111, %v193, 0
    %v210 = vsel %vm111, %v194, 0
    %212 = vmatprep.subr.mxu0 0.0
    %213 = vmatpush1.msra.mxu0 %v195
    %214 = vmatprep.subr.mxu0 0.0
    %215 = vmatpush1.msra.mxu0 %v196
    %216 = vmatprep.subr.mxu0 0.0
    %217 = vmatpush1.msra.mxu0 %v197
    %218 = vmatprep.subr.mxu0 0.0
    %219 = vmatpush1.msra.mxu0 %v198
    %220 = vmatprep.subr.mxu0 0.0
    %221 = vmatpush1.msra.mxu0 0.0
    %222 = vmatprep.subr.mxu0 0.0
    %223 = vmatpush1.msra.mxu0 0.0
    %224 = vmatprep.subr.mxu0 0.0
    %225 = vmatpush1.msra.mxu0 0.0
    %226 = vmatprep.subr.mxu0 0.0
    %227 = vmatpush1.msra.mxu0 0.0
    %228 = vmatprep.subr.mxu0 0.0
    %229 = vmatpush1.msra.mxu0 0.0
    %230 = vmatprep.subr.mxu0 0.0
    %231 = vmatpush1.msra.mxu0 0.0
    %232 = vmatprep.subr.mxu0 0.0
    %233 = vmatpush1.msra.mxu0 0.0
    %234 = vmatprep.subr.mxu0 0.0
    %235 = vmatpush1.msra.mxu0 0.0
    %236 = vmatprep.subr.mxu0 0.0
    %237 = vmatpush1.msra.mxu0 0.0
    %238 = vmatprep.subr.mxu0 0.0
    %239 = vmatpush1.msra.mxu0 0.0
    %240 = vmatprep.subr.mxu0 0.0
    %241 = vmatpush1.msra.mxu0 0.0
    %242 = vmatprep.subr.mxu0 0.0
    %243 = vmatpush1.msra.mxu0 0.0
    %244 = vmatprep.subr.mxu0 0.0
    %245 = vmatpush1.msra.mxu0 0.0
    %246 = vmatprep.subr.mxu0 0.0
    %247 = vmatpush1.msra.mxu0 0.0
    %248 = vmatprep.subr.mxu0 0.0
    %249 = vmatpush1.msra.mxu0 0.0
    %250 = vmatprep.subr.mxu0 0.0
    %251 = vmatpush1.msra.mxu0 0.0
    %252 = vmatprep.subr.mxu0 0.0
    %253 = vmatpush1.msra.mxu0 0.0
    %254 = vmatprep.subr.mxu0 0.0
    %255 = vmatpush1.msra.mxu0 0.0
    %256 = vmatprep.subr.mxu0 0.0
    %257 = vmatpush1.msra.mxu0 0.0
    %258 = vmatprep.subr.mxu0 0.0
    %259 = vmatpush1.msra.mxu0 0.0
    %260 = vmatprep.subr.mxu0 0.0
    %261 = vmatpush1.msra.mxu0 0.0
    %262 = vmatprep.subr.mxu0 0.0
    %263 = vmatpush1.msra.mxu0 0.0
    %264 = vmatprep.subr.mxu0 0.0
    %265 = vmatpush1.msra.mxu0 0.0
    %266 = vmatprep.subr.mxu0 0.0
    %267 = vmatpush1.msra.mxu0 0.0
    %268 = vmatprep.subr.mxu0 0.0
    %269 = vmatpush1.msra.mxu0 0.0
    %270 = vmatprep.subr.mxu0 0.0
    %271 = vmatpush1.msra.mxu0 0.0
    %272 = vmatprep.subr.mxu0 0.0
    %273 = vmatpush1.msra.mxu0 0.0
    %274 = vmatprep.subr.mxu0 0.0
    %275 = vmatpush1.msra.mxu0 0.0
    %276 = vmatprep.mubr.f32.mxu0 0.0
    %277 = vmatmul.mubr.f32.gmra.mrb[0].mxu0 %v207
    %v278 = vpop.f32.mrb[0].mxu0
    %v279 = vadd.f32 %v204, %v278
    %v280 = vpop.f32.mrb[0].mxu0
    %281 = vmatprep.mubr.f32.mxu0 0.0
    %282 = vmatmul.mubr.f32.gmra.mrb[0].mxu0 %v210
    %v283 = vpop.f32.mrb[0].mxu0
    %v284 = vadd.f32 %v204, %v283
    %v285 = vpop.f32.mrb[0].mxu0
    %286 = vdwg.mxu0
    %vm287 = vcmask 64512
    %v289 = vsel %vm287, %v185, 0
    %v292 = vsel %vm287, %v279, 0
    %294 = vmatprep.subr.mxu0 0.0
    %295 = vmatpush1.xpose.msra.mxu0 %v292
    %296 = vmatprep.subr.mxu0 0.0
    %297 = vmatpush1.xpose.msra.mxu0 0.0
    %298 = vmatprep.subr.mxu0 0.0
    %299 = vmatpush1.xpose.msra.mxu0 0.0
    %300 = vmatprep.subr.mxu0 0.0
    %301 = vmatpush1.xpose.msra.mxu0 0.0
    %302 = vmatprep.subr.mxu0 0.0
    %303 = vmatpush1.xpose.msra.mxu0 0.0
    %304 = vmatprep.subr.mxu0 0.0
    %305 = vmatpush1.xpose.msra.mxu0 0.0
    %306 = vmatprep.subr.mxu0 0.0
    %307 = vmatpush1.xpose.msra.mxu0 0.0
    %308 = vmatprep.subr.mxu0 0.0
    %309 = vmatpush1.xpose.msra.mxu0 0.0
    %310 = vmatprep.subr.mxu0 0.0
    %311 = vmatpush1.xpose.msra.mxu0 0.0
    %312 = vmatprep.subr.mxu0 0.0
    %313 = vmatpush1.xpose.msra.mxu0 0.0
    %314 = vmatprep.subr.mxu0 0.0
    %315 = vmatpush1.xpose.msra.mxu0 0.0
    %316 = vmatprep.subr.mxu0 0.0
    %317 = vmatpush1.xpose.msra.mxu0 0.0
    %318 = vmatprep.subr.mxu0 0.0
    %319 = vmatpush1.xpose.msra.mxu0 0.0
    %320 = vmatprep.subr.mxu0 0.0
    %321 = vmatpush1.xpose.msra.mxu0 0.0
    %322 = vmatprep.subr.mxu0 0.0
    %323 = vmatpush1.xpose.msra.mxu0 0.0
    %324 = vmatprep.subr.mxu0 0.0
    %325 = vmatpush1.xpose.msra.mxu0 0.0
    %326 = vmatprep.subr.mxu0 0.0
    %327 = vmatpush1.xpose.msra.mxu0 0.0
    %328 = vmatprep.subr.mxu0 0.0
    %329 = vmatpush1.xpose.msra.mxu0 0.0
    %330 = vmatprep.subr.mxu0 0.0
    %331 = vmatpush1.xpose.msra.mxu0 0.0
    %332 = vmatprep.subr.mxu0 0.0
    %333 = vmatpush1.xpose.msra.mxu0 0.0
    %334 = vmatprep.subr.mxu0 0.0
    %335 = vmatpush1.xpose.msra.mxu0 0.0
    %336 = vmatprep.subr.mxu0 0.0
    %337 = vmatpush1.xpose.msra.mxu0 0.0
    %338 = vmatprep.subr.mxu0 0.0
    %339 = vmatpush1.xpose.msra.mxu0 0.0
    %340 = vmatprep.subr.mxu0 0.0
    %341 = vmatpush1.xpose.msra.mxu0 0.0
    %342 = vmatprep.subr.mxu0 0.0
    %343 = vmatpush1.xpose.msra.mxu0 0.0
    %344 = vmatprep.subr.mxu0 0.0
    %345 = vmatpush1.xpose.msra.mxu0 0.0
    %346 = vmatprep.subr.mxu0 0.0
    %347 = vmatpush1.xpose.msra.mxu0 0.0
    %348 = vmatprep.subr.mxu0 0.0
    %349 = vmatpush1.xpose.msra.mxu0 0.0
    %350 = vmatprep.subr.mxu0 0.0
    %351 = vmatpush1.xpose.msra.mxu0 0.0
    %352 = vmatprep.subr.mxu0 0.0
    %353 = vmatpush1.xpose.msra.mxu0 0.0
    %354 = vmatprep.subr.mxu0 0.0
    %355 = vmatpush1.xpose.msra.mxu0 0.0
    %356 = vmatprep.subr.mxu0 0.0
    %357 = vmatpush1.xpose.msra.mxu0 0.0
    %358 = vmatprep.mubr.f32.mxu0 0.0
    %359 = vmatmul.mubr.f32.gmra.mrb[0].mxu0 %v289
    %v360 = vpop.f32.mrb[0].mxu0
    %v361 = vadd.f32 0.0, %v360
    %v362 = vpop.f32.mrb[0].mxu0
    %363 = vdwg.mxu0
    %v364 = vsel %vm287, %v361, -inf
    %365 = vmax.xlane.f32.xlu0 %v364
    %v366 = vpop.xlane.xlu0 %365
    %v367 = vsub.f32 %v361, %v366
    %v368 = vmul.f32 %v367, 1.442695
    %v369 = vpow.pop %v368
    %v370 = vsel %vm287, %v369, 0.0
    %371 = vadd.xlane.f32.xlu0 %v370
    %v372 = vpop.xlane.xlu0 %371
    %v373 = vrcp.pop %v372
    %v374 = vmul.f32 %v369, %v373
    %375 = vrot.lane.b32.xlu0 %v279, 96
    %v376 = vpop.permute.xlu0 %375
    %v379 = vsel %vm287, %v374, 0
    %381 = vmatprep.subr.mxu0 0.0
    %382 = vmatpush1.msra.mxu0 %v376
    %383 = vmatprep.subr.mxu0 0.0
    %384 = vmatpush1.msra.mxu0 0.0
    %385 = vmatprep.subr.mxu0 0.0
    %386 = vmatpush1.msra.mxu0 0.0
    %387 = vmatprep.subr.mxu0 0.0
    %388 = vmatpush1.msra.mxu0 0.0
    %389 = vmatprep.subr.mxu0 0.0
    %390 = vmatpush1.msra.mxu0 0.0
    %391 = vmatprep.subr.mxu0 0.0
    %392 = vmatpush1.msra.mxu0 0.0
    %393 = vmatprep.subr.mxu0 0.0
    %394 = vmatpush1.msra.mxu0 0.0
    %395 = vmatprep.subr.mxu0 0.0
    %396 = vmatpush1.msra.mxu0 0.0
    %397 = vmatprep.subr.mxu0 0.0
    %398 = vmatpush1.msra.mxu0 0.0
    %399 = vmatprep.subr.mxu0 0.0
    %400 = vmatpush1.msra.mxu0 0.0
    %401 = vmatprep.subr.mxu0 0.0
    %402 = vmatpush1.msra.mxu0 0.0
    %403 = vmatprep.subr.mxu0 0.0
    %404 = vmatpush1.msra.mxu0 0.0
    %405 = vmatprep.subr.mxu0 0.0
    %406 = vmatpush1.msra.mxu0 0.0
    %407 = vmatprep.subr.mxu0 0.0
    %408 = vmatpush1.msra.mxu0 0.0
    %409 = vmatprep.subr.mxu0 0.0
    %410 = vmatpush1.msra.mxu0 0.0
    %411 = vmatprep.subr.mxu0 0.0
    %412 = vmatpush1.msra.mxu0 0.0
    %413 = vmatprep.subr.mxu0 0.0
    %414 = vmatpush1.msra.mxu0 0.0
    %415 = vmatprep.subr.mxu0 0.0
    %416 = vmatpush1.msra.mxu0 0.0
    %417 = vmatprep.subr.mxu0 0.0
    %418 = vmatpush1.msra.mxu0 0.0
    %419 = vmatprep.subr.mxu0 0.0
    %420 = vmatpush1.msra.mxu0 0.0
    %421 = vmatprep.subr.mxu0 0.0
    %422 = vmatpush1.msra.mxu0 0.0
    %423 = vmatprep.subr.mxu0 0.0
    %424 = vmatpush1.msra.mxu0 0.0
    %425 = vmatprep.subr.mxu0 0.0
    %426 = vmatpush1.msra.mxu0 0.0
    %427 = vmatprep.subr.mxu0 0.0
    %428 = vmatpush1.msra.mxu0 0.0
    %429 = vmatprep.subr.mxu0 0.0
    %430 = vmatpush1.msra.mxu0 0.0
    %431 = vmatprep.subr.mxu0 0.0
    %432 = vmatpush1.msra.mxu0 0.0
    %433 = vmatprep.subr.mxu0 0.0
    %434 = vmatpush1.msra.mxu0 0.0
    %435 = vmatprep.subr.mxu0 0.0
    %436 = vmatpush1.msra.mxu0 0.0
    %437 = vmatprep.subr.mxu0 0.0
    %438 = vmatpush1.msra.mxu0 0.0
    %439 = vmatprep.subr.mxu0 0.0
    %440 = vmatpush1.msra.mxu0 0.0
    %441 = vmatprep.subr.mxu0 0.0
    %442 = vmatpush1.msra.mxu0 0.0
    %443 = vmatprep.subr.mxu0 0.0
    %444 = vmatpush1.msra.mxu0 0.0
    %445 = vmatprep.mubr.f32.mxu0 0.0
    %446 = vmatmul.mubr.f32.gmra.mrb[0].mxu0 %v379
    %v447 = vpop.f32.mrb[0].mxu0
    %v448 = vadd.f32 0.0, %v447
    %v449 = vpop.f32.mrb[0].mxu0
    %450 = vdwg.mxu0
    %451 = vrot.lane.b32.xlu0 %v185, 120
    %v452 = vpop.permute.xlu0 %451
    %453 = vrot.lane.b32.xlu0 %v279, 120
    %v454 = vpop.permute.xlu0 %453
    %v455 = vsel %vm287, %v452, 0
    %v457 = vsel %vm287, %v454, 0
    %459 = vmatprep.subr.mxu0 0.0
    %460 = vmatpush1.xpose.msra.mxu0 %v457
    %461 = vmatprep.subr.mxu0 0.0
    %462 = vmatpush1.xpose.msra.mxu0 0.0
    %463 = vmatprep.subr.mxu0 0.0
    %464 = vmatpush1.xpose.msra.mxu0 0.0
    %465 = vmatprep.subr.mxu0 0.0
    %466 = vmatpush1.xpose.msra.mxu0 0.0
    %467 = vmatprep.subr.mxu0 0.0
    %468 = vmatpush1.xpose.msra.mxu0 0.0
    %469 = vmatprep.subr.mxu0 0.0
    %470 = vmatpush1.xpose.msra.mxu0 0.0
    %471 = vmatprep.subr.mxu0 0.0
    %472 = vmatpush1.xpose.msra.mxu0 0.0
    %473 = vmatprep.subr.mxu0 0.0
    %474 = vmatpush1.xpose.msra.mxu0 0.0
    %475 = vmatprep.subr.mxu0 0.0
    %476 = vmatpush1.xpose.msra.mxu0 0.0
    %477 = vmatprep.subr.mxu0 0.0
    %478 = vmatpush1.xpose.msra.mxu0 0.0
    %479 = vmatprep.subr.mxu0 0.0
    %480 = vmatpush1.xpose.msra.mxu0 0.0
    %481 = vmatprep.subr.mxu0 0.0
    %482 = vmatpush1.xpose.msra.mxu0 0.0
    %483 = vmatprep.subr.mxu0 0.0
    %484 = vmatpush1.xpose.msra.mxu0 0.0
    %485 = vmatprep.subr.mxu0 0.0
    %486 = vmatpush1.xpose.msra.mxu0 0.0
    %487 = vmatprep.subr.mxu0 0.0
    %488 = vmatpush1.xpose.msra.mxu0 0.0
    %489 = vmatprep.subr.mxu0 0.0
    %490 = vmatpush1.xpose.msra.mxu0 0.0
    %491 = vmatprep.subr.mxu0 0.0
    %492 = vmatpush1.xpose.msra.mxu0 0.0
    %493 = vmatprep.subr.mxu0 0.0
    %494 = vmatpush1.xpose.msra.mxu0 0.0
    %495 = vmatprep.subr.mxu0 0.0
    %496 = vmatpush1.xpose.msra.mxu0 0.0
    %497 = vmatprep.subr.mxu0 0.0
    %498 = vmatpush1.xpose.msra.mxu0 0.0
    %499 = vmatprep.subr.mxu0 0.0
    %500 = vmatpush1.xpose.msra.mxu0 0.0
    %501 = vmatprep.subr.mxu0 0.0
    %502 = vmatpush1.xpose.msra.mxu0 0.0
    %503 = vmatprep.subr.mxu0 0.0
    %504 = vmatpush1.xpose.msra.mxu0 0.0
    %505 = vmatprep.subr.mxu0 0.0
    %506 = vmatpush1.xpose.msra.mxu0 0.0
    %507 = vmatprep.subr.mxu0 0.0
    %508 = vmatpush1.xpose.msra.mxu0 0.0
    %509 = vmatprep.subr.mxu0 0.0
    %510 = vmatpush1.xpose.msra.mxu0 0.0
    %511 = vmatprep.subr.mxu0 0.0
    %512 = vmatpush1.xpose.msra.mxu0 0.0
    %513 = vmatprep.subr.mxu0 0.0
    %514 = vmatpush1.xpose.msra.mxu0 0.0
    %515 = vmatprep.subr.mxu0 0.0
    %516 = vmatpush1.xpose.msra.mxu0 0.0
    %517 = vmatprep.subr.mxu0 0.0
    %518 = vmatpush1.xpose.msra.mxu0 0.0
    %519 = vmatprep.subr.mxu0 0.0
    %520 = vmatpush1.xpose.msra.mxu0 0.0
    %521 = vmatprep.subr.mxu0 0.0
    %522 = vmatpush1.xpose.msra.mxu0 0.0
    %523 = vmatprep.mubr.f32.mxu0 0.0
    %524 = vmatmul.mubr.f32.gmra.mrb[0].mxu0 %v455
    %v525 = vpop.f32.mrb[0].mxu0
    %v526 = vadd.f32 0.0, %v525
    %v527 = vpop.f32.mrb[0].mxu0
    %528 = vdwg.mxu0
    %v529 = vsel %vm287, %v526, -inf
    %530 = vmax.xlane.f32.xlu0 %v529
    %v531 = vpop.xlane.xlu0 %530
    %v532 = vsub.f32 %v526, %v531
    %v533 = vmul.f32 %v532, 1.442695
    %v534 = vpow.pop %v533
    %v535 = vsel %vm287, %v534, 0.0
    %536 = vadd.xlane.f32.xlu0 %v535
    %v537 = vpop.xlane.xlu0 %536
    %v538 = vrcp.pop %v537
    %v539 = vmul.f32 %v534, %v538
    %540 = vrot.lane.b32.xlu0 %v279, 88
    %v541 = vpop.permute.xlu0 %540
    %v544 = vsel %vm287, %v539, 0
    %546 = vmatprep.subr.mxu0 0.0
    %547 = vmatpush1.msra.mxu0 %v541
    %548 = vmatprep.subr.mxu0 0.0
    %549 = vmatpush1.msra.mxu0 0.0
    %550 = vmatprep.subr.mxu0 0.0
    %551 = vmatpush1.msra.mxu0 0.0
    %552 = vmatprep.subr.mxu0 0.0
    %553 = vmatpush1.msra.mxu0 0.0
    %554 = vmatprep.subr.mxu0 0.0
    %555 = vmatpush1.msra.mxu0 0.0
    %556 = vmatprep.subr.mxu0 0.0
    %557 = vmatpush1.msra.mxu0 0.0
    %558 = vmatprep.subr.mxu0 0.0
    %559 = vmatpush1.msra.mxu0 0.0
    %560 = vmatprep.subr.mxu0 0.0
    %561 = vmatpush1.msra.mxu0 0.0
    %562 = vmatprep.subr.mxu0 0.0
    %563 = vmatpush1.msra.mxu0 0.0
    %564 = vmatprep.subr.mxu0 0.0
    %565 = vmatpush1.msra.mxu0 0.0
    %566 = vmatprep.subr.mxu0 0.0
    %567 = vmatpush1.msra.mxu0 0.0
    %568 = vmatprep.subr.mxu0 0.0
    %569 = vmatpush1.msra.mxu0 0.0
    %570 = vmatprep.subr.mxu0 0.0
    %571 = vmatpush1.msra.mxu0 0.0
    %572 = vmatprep.subr.mxu0 0.0
    %573 = vmatpush1.msra.mxu0 0.0
    %574 = vmatprep.subr.mxu0 0.0
    %575 = vmatpush1.msra.mxu0 0.0
    %576 = vmatprep.subr.mxu0 0.0
    %577 = vmatpush1.msra.mxu0 0.0
    %578 = vmatprep.subr.mxu0 0.0
    %579 = vmatpush1.msra.mxu0 0.0
    %580 = vmatprep.subr.mxu0 0.0
    %581 = vmatpush1.msra.mxu0 0.0
    %582 = vmatprep.subr.mxu0 0.0
    %583 = vmatpush1.msra.mxu0 0.0
    %584 = vmatprep.subr.mxu0 0.0
    %585 = vmatpush1.msra.mxu0 0.0
    %586 = vmatprep.subr.mxu0 0.0
    %587 = vmatpush1.msra.mxu0 0.0
    %588 = vmatprep.subr.mxu0 0.0
    %589 = vmatpush1.msra.mxu0 0.0
    %590 = vmatprep.subr.mxu0 0.0
    %591 = vmatpush1.msra.mxu0 0.0
    %592 = vmatprep.subr.mxu0 0.0
    %593 = vmatpush1.msra.mxu0 0.0
    %594 = vmatprep.subr.mxu0 0.0
    %595 = vmatpush1.msra.mxu0 0.0
    %596 = vmatprep.subr.mxu0 0.0
    %597 = vmatpush1.msra.mxu0 0.0
    %598 = vmatprep.subr.mxu0 0.0
    %599 = vmatpush1.msra.mxu0 0.0
    %600 = vmatprep.subr.mxu0 0.0
    %601 = vmatpush1.msra.mxu0 0.0
    %602 = vmatprep.subr.mxu0 0.0
    %603 = vmatpush1.msra.mxu0 0.0
    %604 = vmatprep.subr.mxu0 0.0
    %605 = vmatpush1.msra.mxu0 0.0
    %606 = vmatprep.subr.mxu0 0.0
    %607 = vmatpush1.msra.mxu0 0.0
    %608 = vmatprep.subr.mxu0 0.0
    %609 = vmatpush1.msra.mxu0 0.0
    %610 = vmatprep.mubr.f32.mxu0 0.0
    %611 = vmatmul.mubr.f32.gmra.mrb[0].mxu0 %v544
    %v612 = vpop.f32.mrb[0].mxu0
    %v613 = vadd.f32 0.0, %v612
    %v614 = vpop.f32.mrb[0].mxu0
    %615 = vdwg.mxu0
    %616 = vrot.lane.b32.xlu0 %v185, 112
    %v617 = vpop.permute.xlu0 %616
    %618 = vrot.lane.b32.xlu0 %v279, 112
    %v619 = vpop.permute.xlu0 %618
    %v620 = vsel %vm287, %v617, 0
    %v622 = vsel %vm287, %v619, 0
    %624 = vmatprep.subr.mxu0 0.0
    %625 = vmatpush1.xpose.msra.mxu0 %v622
    %626 = vmatprep.subr.mxu0 0.0
    %627 = vmatpush1.xpose.msra.mxu0 0.0
    %628 = vmatprep.subr.mxu0 0.0
    %629 = vmatpush1.xpose.msra.mxu0 0.0
    %630 = vmatprep.subr.mxu0 0.0
    %631 = vmatpush1.xpose.msra.mxu0 0.0
    %632 = vmatprep.subr.mxu0 0.0
    %633 = vmatpush1.xpose.msra.mxu0 0.0
    %634 = vmatprep.subr.mxu0 0.0
    %635 = vmatpush1.xpose.msra.mxu0 0.0
    %636 = vmatprep.subr.mxu0 0.0
    %637 = vmatpush1.xpose.msra.mxu0 0.0
    %638 = vmatprep.subr.mxu0 0.0
    %639 = vmatpush1.xpose.msra.mxu0 0.0
    %640 = vmatprep.subr.mxu0 0.0
    %641 = vmatpush1.xpose.msra.mxu0 0.0
    %642 = vmatprep.subr.mxu0 0.0
    %643 = vmatpush1.xpose.msra.mxu0 0.0
    %644 = vmatprep.subr.mxu0 0.0
    %645 = vmatpush1.xpose.msra.mxu0 0.0
    %646 = vmatprep.subr.mxu0 0.0
    %647 = vmatpush1.xpose.msra.mxu0 0.0
    %648 = vmatprep.subr.mxu0 0.0
    %649 = vmatpush1.xpose.msra.mxu0 0.0
    %650 = vmatprep.subr.mxu0 0.0
    %651 = vmatpush1.xpose.msra.mxu0 0.0
    %652 = vmatprep.subr.mxu0 0.0
    %653 = vmatpush1.xpose.msra.mxu0 0.0
    %654 = vmatprep.subr.mxu0 0.0
    %655 = vmatpush1.xpose.msra.mxu0 0.0
    %656 = vmatprep.subr.mxu0 0.0
    %657 = vmatpush1.xpose.msra.mxu0 0.0
    %658 = vmatprep.subr.mxu0 0.0
    %659 = vmatpush1.xpose.msra.mxu0 0.0
    %660 = vmatprep.subr.mxu0 0.0
    %661 = vmatpush1.xpose.msra.mxu0 0.0
    %662 = vmatprep.subr.mxu0 0.0
    %663 = vmatpush1.xpose.msra.mxu0 0.0
    %664 = vmatprep.subr.mxu0 0.0
    %665 = vmatpush1.xpose.msra.mxu0 0.0
    %666 = vmatprep.subr.mxu0 0.0
    %667 = vmatpush1.xpose.msra.mxu0 0.0
    %668 = vmatprep.subr.mxu0 0.0
    %669 = vmatpush1.xpose.msra.mxu0 0.0
    %670 = vmatprep.subr.mxu0 0.0
    %671 = vmatpush1.xpose.msra.mxu0 0.0
    %672 = vmatprep.subr.mxu0 0.0
    %673 = vmatpush1.xpose.msra.mxu0 0.0
    %674 = vmatprep.subr.mxu0 0.0
    %675 = vmatpush1.xpose.msra.mxu0 0.0
    %676 = vmatprep.subr.mxu0 0.0
    %677 = vmatpush1.xpose.msra.mxu0 0.0
    %678 = vmatprep.subr.mxu0 0.0
    %679 = vmatpush1.xpose.msra.mxu0 0.0
    %680 = vmatprep.subr.mxu0 0.0
    %681 = vmatpush1.xpose.msra.mxu0 0.0
    %682 = vmatprep.subr.mxu0 0.0
    %683 = vmatpush1.xpose.msra.mxu0 0.0
    %684 = vmatprep.subr.mxu0 0.0
    %685 = vmatpush1.xpose.msra.mxu0 0.0
    %686 = vmatprep.subr.mxu0 0.0
    %687 = vmatpush1.xpose.msra.mxu0 0.0
    %688 = vmatprep.mubr.f32.mxu0 0.0
    %689 = vmatmul.mubr.f32.gmra.mrb[0].mxu0 %v620
    %v690 = vpop.f32.mrb[0].mxu0
    %v691 = vadd.f32 0.0, %v690
    %v692 = vpop.f32.mrb[0].mxu0
    %693 = vdwg.mxu0
    %v694 = vsel %vm287, %v691, -inf
    %695 = vmax.xlane.f32.xlu0 %v694
    %v696 = vpop.xlane.xlu0 %695
    %v697 = vsub.f32 %v691, %v696
    %v698 = vmul.f32 %v697, 1.442695
    %v699 = vpow.pop %v698
    %v700 = vsel %vm287, %v699, 0.0
    %701 = vadd.xlane.f32.xlu0 %v700
    %v702 = vpop.xlane.xlu0 %701
    %v703 = vrcp.pop %v702
    %v704 = vmul.f32 %v699, %v703
    %705 = vrot.lane.b32.xlu0 %v279, 80
    %v706 = vpop.permute.xlu0 %705
    %v709 = vsel %vm287, %v704, 0
    %711 = vmatprep.subr.mxu0 0.0
    %712 = vmatpush1.msra.mxu0 %v706
    %713 = vmatprep.subr.mxu0 0.0
    %714 = vmatpush1.msra.mxu0 0.0
    %715 = vmatprep.subr.mxu0 0.0
    %716 = vmatpush1.msra.mxu0 0.0
    %717 = vmatprep.subr.mxu0 0.0
    %718 = vmatpush1.msra.mxu0 0.0
    %719 = vmatprep.subr.mxu0 0.0
    %720 = vmatpush1.msra.mxu0 0.0
    %721 = vmatprep.subr.mxu0 0.0
    %722 = vmatpush1.msra.mxu0 0.0
    %723 = vmatprep.subr.mxu0 0.0
    %724 = vmatpush1.msra.mxu0 0.0
    %725 = vmatprep.subr.mxu0 0.0
    %726 = vmatpush1.msra.mxu0 0.0
    %727 = vmatprep.subr.mxu0 0.0
    %728 = vmatpush1.msra.mxu0 0.0
    %729 = vmatprep.subr.mxu0 0.0
    %730 = vmatpush1.msra.mxu0 0.0
    %731 = vmatprep.subr.mxu0 0.0
    %732 = vmatpush1.msra.mxu0 0.0
    %733 = vmatprep.subr.mxu0 0.0
    %734 = vmatpush1.msra.mxu0 0.0
    %735 = vmatprep.subr.mxu0 0.0
    %736 = vmatpush1.msra.mxu0 0.0
    %737 = vmatprep.subr.mxu0 0.0
    %738 = vmatpush1.msra.mxu0 0.0
    %739 = vmatprep.subr.mxu0 0.0
    %740 = vmatpush1.msra.mxu0 0.0
    %741 = vmatprep.subr.mxu0 0.0
    %742 = vmatpush1.msra.mxu0 0.0
    %743 = vmatprep.subr.mxu0 0.0
    %744 = vmatpush1.msra.mxu0 0.0
    %745 = vmatprep.subr.mxu0 0.0
    %746 = vmatpush1.msra.mxu0 0.0
    %747 = vmatprep.subr.mxu0 0.0
    %748 = vmatpush1.msra.mxu0 0.0
    %749 = vmatprep.subr.mxu0 0.0
    %750 = vmatpush1.msra.mxu0 0.0
    %751 = vmatprep.subr.mxu0 0.0
    %752 = vmatpush1.msra.mxu0 0.0
    %753 = vmatprep.subr.mxu0 0.0
    %754 = vmatpush1.msra.mxu0 0.0
    %755 = vmatprep.subr.mxu0 0.0
    %756 = vmatpush1.msra.mxu0 0.0
    %757 = vmatprep.subr.mxu0 0.0
    %758 = vmatpush1.msra.mxu0 0.0
    %759 = vmatprep.subr.mxu0 0.0
    %760 = vmatpush1.msra.mxu0 0.0
    %761 = vmatprep.subr.mxu0 0.0
    %762 = vmatpush1.msra.mxu0 0.0
    %763 = vmatprep.subr.mxu0 0.0
    %764 = vmatpush1.msra.mxu0 0.0
    %765 = vmatprep.subr.mxu0 0.0
    %766 = vmatpush1.msra.mxu0 0.0
    %767 = vmatprep.subr.mxu0 0.0
    %768 = vmatpush1.msra.mxu0 0.0
    %769 = vmatprep.subr.mxu0 0.0
    %770 = vmatpush1.msra.mxu0 0.0
    %771 = vmatprep.subr.mxu0 0.0
    %772 = vmatpush1.msra.mxu0 0.0
    %773 = vmatprep.subr.mxu0 0.0
    %774 = vmatpush1.msra.mxu0 0.0
    %775 = vmatprep.mubr.f32.mxu0 0.0
    %776 = vmatmul.mubr.f32.gmra.mrb[0].mxu0 %v709
    %v777 = vpop.f32.mrb[0].mxu0
    %v778 = vadd.f32 0.0, %v777
    %v779 = vpop.f32.mrb[0].mxu0
    %780 = vdwg.mxu0
    %781 = vrot.lane.b32.xlu0 %v185, 104
    %v782 = vpop.permute.xlu0 %781
    %783 = vrot.lane.b32.xlu0 %v279, 104
    %v784 = vpop.permute.xlu0 %783
    %v785 = vsel %vm287, %v782, 0
    %v787 = vsel %vm287, %v784, 0
    %789 = vmatprep.subr.mxu0 0.0
    %790 = vmatpush1.xpose.msra.mxu0 %v787
    %791 = vmatprep.subr.mxu0 0.0
    %792 = vmatpush1.xpose.msra.mxu0 0.0
    %793 = vmatprep.subr.mxu0 0.0
    %794 = vmatpush1.xpose.msra.mxu0 0.0
    %795 = vmatprep.subr.mxu0 0.0
    %796 = vmatpush1.xpose.msra.mxu0 0.0
    %797 = vmatprep.subr.mxu0 0.0
    %798 = vmatpush1.xpose.msra.mxu0 0.0
    %799 = vmatprep.subr.mxu0 0.0
    %800 = vmatpush1.xpose.msra.mxu0 0.0
    %801 = vmatprep.subr.mxu0 0.0
    %802 = vmatpush1.xpose.msra.mxu0 0.0
    %803 = vmatprep.subr.mxu0 0.0
    %804 = vmatpush1.xpose.msra.mxu0 0.0
    %805 = vmatprep.subr.mxu0 0.0
    %806 = vmatpush1.xpose.msra.mxu0 0.0
    %807 = vmatprep.subr.mxu0 0.0
    %808 = vmatpush1.xpose.msra.mxu0 0.0
    %809 = vmatprep.subr.mxu0 0.0
    %810 = vmatpush1.xpose.msra.mxu0 0.0
    %811 = vmatprep.subr.mxu0 0.0
    %812 = vmatpush1.xpose.msra.mxu0 0.0
    %813 = vmatprep.subr.mxu0 0.0
    %814 = vmatpush1.xpose.msra.mxu0 0.0
    %815 = vmatprep.subr.mxu0 0.0
    %816 = vmatpush1.xpose.msra.mxu0 0.0
    %817 = vmatprep.subr.mxu0 0.0
    %818 = vmatpush1.xpose.msra.mxu0 0.0
    %819 = vmatprep.subr.mxu0 0.0
    %820 = vmatpush1.xpose.msra.mxu0 0.0
    %821 = vmatprep.subr.mxu0 0.0
    %822 = vmatpush1.xpose.msra.mxu0 0.0
    %823 = vmatprep.subr.mxu0 0.0
    %824 = vmatpush1.xpose.msra.mxu0 0.0
    %825 = vmatprep.subr.mxu0 0.0
    %826 = vmatpush1.xpose.msra.mxu0 0.0
    %827 = vmatprep.subr.mxu0 0.0
    %828 = vmatpush1.xpose.msra.mxu0 0.0
    %829 = vmatprep.subr.mxu0 0.0
    %830 = vmatpush1.xpose.msra.mxu0 0.0
    %831 = vmatprep.subr.mxu0 0.0
    %832 = vmatpush1.xpose.msra.mxu0 0.0
    %833 = vmatprep.subr.mxu0 0.0
    %834 = vmatpush1.xpose.msra.mxu0 0.0
    %835 = vmatprep.subr.mxu0 0.0
    %836 = vmatpush1.xpose.msra.mxu0 0.0
    %837 = vmatprep.subr.mxu0 0.0
    %838 = vmatpush1.xpose.msra.mxu0 0.0
    %839 = vmatprep.subr.mxu0 0.0
    %840 = vmatpush1.xpose.msra.mxu0 0.0
    %841 = vmatprep.subr.mxu0 0.0
    %842 = vmatpush1.xpose.msra.mxu0 0.0
    %843 = vmatprep.subr.mxu0 0.0
    %844 = vmatpush1.xpose.msra.mxu0 0.0
    %845 = vmatprep.subr.mxu0 0.0
    %846 = vmatpush1.xpose.msra.mxu0 0.0
    %847 = vmatprep.subr.mxu0 0.0
    %848 = vmatpush1.xpose.msra.mxu0 0.0
    %849 = vmatprep.subr.mxu0 0.0
    %850 = vmatpush1.xpose.msra.mxu0 0.0
    %851 = vmatprep.subr.mxu0 0.0
    %852 = vmatpush1.xpose.msra.mxu0 0.0
    %853 = vmatprep.mubr.f32.mxu0 0.0
    %854 = vmatmul.mubr.f32.gmra.mrb[0].mxu0 %v785
    %v855 = vpop.f32.mrb[0].mxu0
    %v856 = vadd.f32 0.0, %v855
    %v857 = vpop.f32.mrb[0].mxu0
    %858 = vdwg.mxu0
    %v859 = vsel %vm287, %v856, -inf
    %860 = vmax.xlane.f32.xlu0 %v859
    %v861 = vpop.xlane.xlu0 %860
    %v862 = vsub.f32 %v856, %v861
    %v863 = vmul.f32 %v862, 1.442695
    %v864 = vpow.pop %v863
    %v865 = vsel %vm287, %v864, 0.0
    %866 = vadd.xlane.f32.xlu0 %v865
    %v867 = vpop.xlane.xlu0 %866
    %v868 = vrcp.pop %v867
    %v869 = vmul.f32 %v864, %v868
    %870 = vrot.lane.b32.xlu0 %v279, 72
    %v871 = vpop.permute.xlu0 %870
    %v874 = vsel %vm287, %v869, 0
    %876 = vmatprep.subr.mxu0 0.0
    %877 = vmatpush1.msra.mxu0 %v871
    %878 = vmatprep.subr.mxu0 0.0
    %879 = vmatpush1.msra.mxu0 0.0
    %880 = vmatprep.subr.mxu0 0.0
    %881 = vmatpush1.msra.mxu0 0.0
    %882 = vmatprep.subr.mxu0 0.0
    %883 = vmatpush1.msra.mxu0 0.0
    %884 = vmatprep.subr.mxu0 0.0
    %885 = vmatpush1.msra.mxu0 0.0
    %886 = vmatprep.subr.mxu0 0.0
    %887 = vmatpush1.msra.mxu0 0.0
    %888 = vmatprep.subr.mxu0 0.0
    %889 = vmatpush1.msra.mxu0 0.0
    %890 = vmatprep.subr.mxu0 0.0
    %891 = vmatpush1.msra.mxu0 0.0
    %892 = vmatprep.subr.mxu0 0.0
    %893 = vmatpush1.msra.mxu0 0.0
    %894 = vmatprep.subr.mxu0 0.0
    %895 = vmatpush1.msra.mxu0 0.0
    %896 = vmatprep.subr.mxu0 0.0
    %897 = vmatpush1.msra.mxu0 0.0
    %898 = vmatprep.subr.mxu0 0.0
    %899 = vmatpush1.msra.mxu0 0.0
    %900 = vmatprep.subr.mxu0 0.0
    %901 = vmatpush1.msra.mxu0 0.0
    %902 = vmatprep.subr.mxu0 0.0
    %903 = vmatpush1.msra.mxu0 0.0
    %904 = vmatprep.subr.mxu0 0.0
    %905 = vmatpush1.msra.mxu0 0.0
    %906 = vmatprep.subr.mxu0 0.0
    %907 = vmatpush1.msra.mxu0 0.0
    %908 = vmatprep.subr.mxu0 0.0
    %909 = vmatpush1.msra.mxu0 0.0
    %910 = vmatprep.subr.mxu0 0.0
    %911 = vmatpush1.msra.mxu0 0.0
    %912 = vmatprep.subr.mxu0 0.0
    %913 = vmatpush1.msra.mxu0 0.0
    %914 = vmatprep.subr.mxu0 0.0
    %915 = vmatpush1.msra.mxu0 0.0
    %916 = vmatprep.subr.mxu0 0.0
    %917 = vmatpush1.msra.mxu0 0.0
    %918 = vmatprep.subr.mxu0 0.0
    %919 = vmatpush1.msra.mxu0 0.0
    %920 = vmatprep.subr.mxu0 0.0
    %921 = vmatpush1.msra.mxu0 0.0
    %922 = vmatprep.subr.mxu0 0.0
    %923 = vmatpush1.msra.mxu0 0.0
    %924 = vmatprep.subr.mxu0 0.0
    %925 = vmatpush1.msra.mxu0 0.0
    %926 = vmatprep.subr.mxu0 0.0
    %927 = vmatpush1.msra.mxu0 0.0
    %928 = vmatprep.subr.mxu0 0.0
    %929 = vmatpush1.msra.mxu0 0.0
    %930 = vmatprep.subr.mxu0 0.0
    %931 = vmatpush1.msra.mxu0 0.0
    %932 = vmatprep.subr.mxu0 0.0
    %933 = vmatpush1.msra.mxu0 0.0
    %934 = vmatprep.subr.mxu0 0.0
    %935 = vmatpush1.msra.mxu0 0.0
    %936 = vmatprep.subr.mxu0 0.0
    %937 = vmatpush1.msra.mxu0 0.0
    %938 = vmatprep.subr.mxu0 0.0
    %939 = vmatpush1.msra.mxu0 0.0
    %940 = vmatprep.mubr.f32.mxu0 0.0
    %941 = vmatmul.mubr.f32.gmra.mrb[0].mxu0 %v874
    %v942 = vpop.f32.mrb[0].mxu0
    %v943 = vadd.f32 0.0, %v942
    %v944 = vpop.f32.mrb[0].mxu0
    %945 = vdwg.mxu0
    %947 = vrot.lane.b32.xlu0 %v613, 8
    %v948 = vpop.permute.xlu0 %947
    %951 = vrot.lane.b32.xlu0 %v778, 16
    %v952 = vpop.permute.xlu0 %951
    %955 = vrot.lane.b32.xlu0 %v943, 24
    %v956 = vpop.permute.xlu0 %955
    %v958 = vsel %vm287, %v448, %v948
    %vm959 = vcmask 130048
    %v960 = vsel %vm959, %v958, %v952
    %vm961 = vcmask 195584
    %v962 = vsel %vm961, %v960, %v956
    %v964 = vsel %vm287, %v190, 0
    %v967 = vsel %vm287, %v284, 0
    %969 = vmatprep.subr.mxu0 0.0
    %970 = vmatpush1.xpose.msra.mxu0 %v967
    %971 = vmatprep.subr.mxu0 0.0
    %972 = vmatpush1.xpose.msra.mxu0 0.0
    %973 = vmatprep.subr.mxu0 0.0
    %974 = vmatpush1.xpose.msra.mxu0 0.0
    %975 = vmatprep.subr.mxu0 0.0
    %976 = vmatpush1.xpose.msra.mxu0 0.0
    %977 = vmatprep.subr.mxu0 0.0
    %978 = vmatpush1.xpose.msra.mxu0 0.0
    %979 = vmatprep.subr.mxu0 0.0
    %980 = vmatpush1.xpose.msra.mxu0 0.0
    %981 = vmatprep.subr.mxu0 0.0
    %982 = vmatpush1.xpose.msra.mxu0 0.0
    %983 = vmatprep.subr.mxu0 0.0
    %984 = vmatpush1.xpose.msra.mxu0 0.0
    %985 = vmatprep.subr.mxu0 0.0
    %986 = vmatpush1.xpose.msra.mxu0 0.0
    %987 = vmatprep.subr.mxu0 0.0
    %988 = vmatpush1.xpose.msra.mxu0 0.0
    %989 = vmatprep.subr.mxu0 0.0
    %990 = vmatpush1.xpose.msra.mxu0 0.0
    %991 = vmatprep.subr.mxu0 0.0
    %992 = vmatpush1.xpose.msra.mxu0 0.0
    %993 = vmatprep.subr.mxu0 0.0
    %994 = vmatpush1.xpose.msra.mxu0 0.0
    %995 = vmatprep.subr.mxu0 0.0
    %996 = vmatpush1.xpose.msra.mxu0 0.0
    %997 = vmatprep.subr.mxu0 0.0
    %998 = vmatpush1.xpose.msra.mxu0 0.0
    %999 = vmatprep.subr.mxu0 0.0
    %1000 = vmatpush1.xpose.msra.mxu0 0.0
    %1001 = vmatprep.subr.mxu0 0.0
    %1002 = vmatpush1.xpose.msra.mxu0 0.0
    %1003 = vmatprep.subr.mxu0 0.0
    %1004 = vmatpush1.xpose.msra.mxu0 0.0
    %1005 = vmatprep.subr.mxu0 0.0
    %1006 = vmatpush1.xpose.msra.mxu0 0.0
    %1007 = vmatprep.subr.mxu0 0.0
    %1008 = vmatpush1.xpose.msra.mxu0 0.0
    %1009 = vmatprep.subr.mxu0 0.0
    %1010 = vmatpush1.xpose.msra.mxu0 0.0
    %1011 = vmatprep.subr.mxu0 0.0
    %1012 = vmatpush1.xpose.msra.mxu0 0.0
    %1013 = vmatprep.subr.mxu0 0.0
    %1014 = vmatpush1.xpose.msra.mxu0 0.0
    %1015 = vmatprep.subr.mxu0 0.0
    %1016 = vmatpush1.xpose.msra.mxu0 0.0
    %1017 = vmatprep.subr.mxu0 0.0
    %1018 = vmatpush1.xpose.msra.mxu0 0.0
    %1019 = vmatprep.subr.mxu0 0.0
    %1020 = vmatpush1.xpose.msra.mxu0 0.0
    %1021 = vmatprep.subr.mxu0 0.0
    %1022 = vmatpush1.xpose.msra.mxu0 0.0
    %1023 = vmatprep.subr.mxu0 0.0
    %1024 = vmatpush1.xpose.msra.mxu0 0.0
    %1025 = vmatprep.subr.mxu0 0.0
    %1026 = vmatpush1.xpose.msra.mxu0 0.0
    %1027 = vmatprep.subr.mxu0 0.0
    %1028 = vmatpush1.xpose.msra.mxu0 0.0
    %1029 = vmatprep.subr.mxu0 0.0
    %1030 = vmatpush1.xpose.msra.mxu0 0.0
    %1031 = vmatprep.subr.mxu0 0.0
    %1032 = vmatpush1.xpose.msra.mxu0 0.0
    %1033 = vmatprep.mubr.f32.mxu0 0.0
    %1034 = vmatmul.mubr.f32.gmra.mrb[0].mxu0 %v964
    %v1035 = vpop.f32.mrb[0].mxu0
    %v1036 = vadd.f32 0.0, %v1035
    %v1037 = vpop.f32.mrb[0].mxu0
    %1038 = vdwg.mxu0
    %v1039 = vsel %vm287, %v1036, -inf
    %1040 = vmax.xlane.f32.xlu0 %v1039
    %v1041 = vpop.xlane.xlu0 %1040
    %v1042 = vsub.f32 %v1036, %v1041
    %v1043 = vmul.f32 %v1042, 1.442695
    %v1044 = vpow.pop %v1043
    %v1045 = vsel %vm287, %v1044, 0.0
    %1046 = vadd.xlane.f32.xlu0 %v1045
    %v1047 = vpop.xlane.xlu0 %1046
    %v1048 = vrcp.pop %v1047
    %v1049 = vmul.f32 %v1044, %v1048
    %1050 = vrot.lane.b32.xlu0 %v284, 96
    %v1051 = vpop.permute.xlu0 %1050
    %v1054 = vsel %vm287, %v1049, 0
    %1056 = vmatprep.subr.mxu0 0.0
    %1057 = vmatpush1.msra.mxu0 %v1051
    %1058 = vmatprep.subr.mxu0 0.0
    %1059 = vmatpush1.msra.mxu0 0.0
    %1060 = vmatprep.subr.mxu0 0.0
    %1061 = vmatpush1.msra.mxu0 0.0
    %1062 = vmatprep.subr.mxu0 0.0
    %1063 = vmatpush1.msra.mxu0 0.0
    %1064 = vmatprep.subr.mxu0 0.0
    %1065 = vmatpush1.msra.mxu0 0.0
    %1066 = vmatprep.subr.mxu0 0.0
    %1067 = vmatpush1.msra.mxu0 0.0
    %1068 = vmatprep.subr.mxu0 0.0
    %1069 = vmatpush1.msra.mxu0 0.0
    %1070 = vmatprep.subr.mxu0 0.0
    %1071 = vmatpush1.msra.mxu0 0.0
    %1072 = vmatprep.subr.mxu0 0.0
    %1073 = vmatpush1.msra.mxu0 0.0
    %1074 = vmatprep.subr.mxu0 0.0
    %1075 = vmatpush1.msra.mxu0 0.0
    %1076 = vmatprep.subr.mxu0 0.0
    %1077 = vmatpush1.msra.mxu0 0.0
    %1078 = vmatprep.subr.mxu0 0.0
    %1079 = vmatpush1.msra.mxu0 0.0
    %1080 = vmatprep.subr.mxu0 0.0
    %1081 = vmatpush1.msra.mxu0 0.0
    %1082 = vmatprep.subr.mxu0 0.0
    %1083 = vmatpush1.msra.mxu0 0.0
    %1084 = vmatprep.subr.mxu0 0.0
    %1085 = vmatpush1.msra.mxu0 0.0
    %1086 = vmatprep.subr.mxu0 0.0
    %1087 = vmatpush1.msra.mxu0 0.0
    %1088 = vmatprep.subr.mxu0 0.0
    %1089 = vmatpush1.msra.mxu0 0.0
    %1090 = vmatprep.subr.mxu0 0.0
    %1091 = vmatpush1.msra.mxu0 0.0
    %1092 = vmatprep.subr.mxu0 0.0
    %1093 = vmatpush1.msra.mxu0 0.0
    %1094 = vmatprep.subr.mxu0 0.0
    %1095 = vmatpush1.msra.mxu0 0.0
    %1096 = vmatprep.subr.mxu0 0.0
    %1097 = vmatpush1.msra.mxu0 0.0
    %1098 = vmatprep.subr.mxu0 0.0
    %1099 = vmatpush1.msra.mxu0 0.0
    %1100 = vmatprep.subr.mxu0 0.0
    %1101 = vmatpush1.msra.mxu0 0.0
    %1102 = vmatprep.subr.mxu0 0.0
    %1103 = vmatpush1.msra.mxu0 0.0
    %1104 = vmatprep.subr.mxu0 0.0
    %1105 = vmatpush1.msra.mxu0 0.0
    %1106 = vmatprep.subr.mxu0 0.0
    %1107 = vmatpush1.msra.mxu0 0.0
    %1108 = vmatprep.subr.mxu0 0.0
    %1109 = vmatpush1.msra.mxu0 0.0
    %1110 = vmatprep.subr.mxu0 0.0
    %1111 = vmatpush1.msra.mxu0 0.0
    %1112 = vmatprep.subr.mxu0 0.0
    %1113 = vmatpush1.msra.mxu0 0.0
    %1114 = vmatprep.subr.mxu0 0.0
    %1115 = vmatpush1.msra.mxu0 0.0
    %1116 = vmatprep.subr.mxu0 0.0
    %1117 = vmatpush1.msra.mxu0 0.0
    %1118 = vmatprep.subr.mxu0 0.0
    %1119 = vmatpush1.msra.mxu0 0.0
    %1120 = vmatprep.mubr.f32.mxu0 0.0
    %1121 = vmatmul.mubr.f32.gmra.mrb[0].mxu0 %v1054
    %v1122 = vpop.f32.mrb[0].mxu0
    %v1123 = vadd.f32 0.0, %v1122
    %v1124 = vpop.f32.mrb[0].mxu0
    %1125 = vdwg.mxu0
    %1126 = vrot.lane.b32.xlu0 %v190, 120
    %v1127 = vpop.permute.xlu0 %1126
    %1128 = vrot.lane.b32.xlu0 %v284, 120
    %v1129 = vpop.permute.xlu0 %1128
    %v1130 = vsel %vm287, %v1127, 0
    %v1132 = vsel %vm287, %v1129, 0
    %1134 = vmatprep.subr.mxu0 0.0
    %1135 = vmatpush1.xpose.msra.mxu0 %v1132
    %1136 = vmatprep.subr.mxu0 0.0
    %1137 = vmatpush1.xpose.msra.mxu0 0.0
    %1138 = vmatprep.subr.mxu0 0.0
    %1139 = vmatpush1.xpose.msra.mxu0 0.0
    %1140 = vmatprep.subr.mxu0 0.0
    %1141 = vmatpush1.xpose.msra.mxu0 0.0
    %1142 = vmatprep.subr.mxu0 0.0
    %1143 = vmatpush1.xpose.msra.mxu0 0.0
    %1144 = vmatprep.subr.mxu0 0.0
    %1145 = vmatpush1.xpose.msra.mxu0 0.0
    %1146 = vmatprep.subr.mxu0 0.0
    %1147 = vmatpush1.xpose.msra.mxu0 0.0
    %1148 = vmatprep.subr.mxu0 0.0
    %1149 = vmatpush1.xpose.msra.mxu0 0.0
    %1150 = vmatprep.subr.mxu0 0.0
    %1151 = vmatpush1.xpose.msra.mxu0 0.0
    %1152 = vmatprep.subr.mxu0 0.0
    %1153 = vmatpush1.xpose.msra.mxu0 0.0
    %1154 = vmatprep.subr.mxu0 0.0
    %1155 = vmatpush1.xpose.msra.mxu0 0.0
    %1156 = vmatprep.subr.mxu0 0.0
    %1157 = vmatpush1.xpose.msra.mxu0 0.0
    %1158 = vmatprep.subr.mxu0 0.0
    %1159 = vmatpush1.xpose.msra.mxu0 0.0
    %1160 = vmatprep.subr.mxu0 0.0
    %1161 = vmatpush1.xpose.msra.mxu0 0.0
    %1162 = vmatprep.subr.mxu0 0.0
    %1163 = vmatpush1.xpose.msra.mxu0 0.0
    %1164 = vmatprep.subr.mxu0 0.0
    %1165 = vmatpush1.xpose.msra.mxu0 0.0
    %1166 = vmatprep.subr.mxu0 0.0
    %1167 = vmatpush1.xpose.msra.mxu0 0.0
    %1168 = vmatprep.subr.mxu0 0.0
    %1169 = vmatpush1.xpose.msra.mxu0 0.0
    %1170 = vmatprep.subr.mxu0 0.0
    %1171 = vmatpush1.xpose.msra.mxu0 0.0
    %1172 = vmatprep.subr.mxu0 0.0
    %1173 = vmatpush1.xpose.msra.mxu0 0.0
    %1174 = vmatprep.subr.mxu0 0.0
    %1175 = vmatpush1.xpose.msra.mxu0 0.0
    %1176 = vmatprep.subr.mxu0 0.0
    %1177 = vmatpush1.xpose.msra.mxu0 0.0
    %1178 = vmatprep.subr.mxu0 0.0
    %1179 = vmatpush1.xpose.msra.mxu0 0.0
    %1180 = vmatprep.subr.mxu0 0.0
    %1181 = vmatpush1.xpose.msra.mxu0 0.0
    %1182 = vmatprep.subr.mxu0 0.0
    %1183 = vmatpush1.xpose.msra.mxu0 0.0
    %1184 = vmatprep.subr.mxu0 0.0
    %1185 = vmatpush1.xpose.msra.mxu0 0.0
    %1186 = vmatprep.subr.mxu0 0.0
    %1187 = vmatpush1.xpose.msra.mxu0 0.0
    %1188 = vmatprep.subr.mxu0 0.0
    %1189 = vmatpush1.xpose.msra.mxu0 0.0
    %1190 = vmatprep.subr.mxu0 0.0
    %1191 = vmatpush1.xpose.msra.mxu0 0.0
    %1192 = vmatprep.subr.mxu0 0.0
    %1193 = vmatpush1.xpose.msra.mxu0 0.0
    %1194 = vmatprep.subr.mxu0 0.0
    %1195 = vmatpush1.xpose.msra.mxu0 0.0
    %1196 = vmatprep.subr.mxu0 0.0
    %1197 = vmatpush1.xpose.msra.mxu0 0.0
    %1198 = vmatprep.mubr.f32.mxu0 0.0
    %1199 = vmatmul.mubr.f32.gmra.mrb[0].mxu0 %v1130
    %v1200 = vpop.f32.mrb[0].mxu0
    %v1201 = vadd.f32 0.0, %v1200
    %v1202 = vpop.f32.mrb[0].mxu0
    %1203 = vdwg.mxu0
    %v1204 = vsel %vm287, %v1201, -inf
    %1205 = vmax.xlane.f32.xlu0 %v1204
    %v1206 = vpop.xlane.xlu0 %1205
    %v1207 = vsub.f32 %v1201, %v1206
    %v1208 = vmul.f32 %v1207, 1.442695
    %v1209 = vpow.pop %v1208
    %v1210 = vsel %vm287, %v1209, 0.0
    %1211 = vadd.xlane.f32.xlu0 %v1210
    %v1212 = vpop.xlane.xlu0 %1211
    %v1213 = vrcp.pop %v1212
    %v1214 = vmul.f32 %v1209, %v1213
    %1215 = vrot.lane.b32.xlu0 %v284, 88
    %v1216 = vpop.permute.xlu0 %1215
    %v1219 = vsel %vm287, %v1214, 0
    %1221 = vmatprep.subr.mxu0 0.0
    %1222 = vmatpush1.msra.mxu0 %v1216
    %1223 = vmatprep.subr.mxu0 0.0
    %1224 = vmatpush1.msra.mxu0 0.0
    %1225 = vmatprep.subr.mxu0 0.0
    %1226 = vmatpush1.msra.mxu0 0.0
    %1227 = vmatprep.subr.mxu0 0.0
    %1228 = vmatpush1.msra.mxu0 0.0
    %1229 = vmatprep.subr.mxu0 0.0
    %1230 = vmatpush1.msra.mxu0 0.0
    %1231 = vmatprep.subr.mxu0 0.0
    %1232 = vmatpush1.msra.mxu0 0.0
    %1233 = vmatprep.subr.mxu0 0.0
    %1234 = vmatpush1.msra.mxu0 0.0
    %1235 = vmatprep.subr.mxu0 0.0
    %1236 = vmatpush1.msra.mxu0 0.0
    %1237 = vmatprep.subr.mxu0 0.0
    %1238 = vmatpush1.msra.mxu0 0.0
    %1239 = vmatprep.subr.mxu0 0.0
    %1240 = vmatpush1.msra.mxu0 0.0
    %1241 = vmatprep.subr.mxu0 0.0
    %1242 = vmatpush1.msra.mxu0 0.0
    %1243 = vmatprep.subr.mxu0 0.0
    %1244 = vmatpush1.msra.mxu0 0.0
    %1245 = vmatprep.subr.mxu0 0.0
    %1246 = vmatpush1.msra.mxu0 0.0
    %1247 = vmatprep.subr.mxu0 0.0
    %1248 = vmatpush1.msra.mxu0 0.0
    %1249 = vmatprep.subr.mxu0 0.0
    %1250 = vmatpush1.msra.mxu0 0.0
    %1251 = vmatprep.subr.mxu0 0.0
    %1252 = vmatpush1.msra.mxu0 0.0
    %1253 = vmatprep.subr.mxu0 0.0
    %1254 = vmatpush1.msra.mxu0 0.0
    %1255 = vmatprep.subr.mxu0 0.0
    %1256 = vmatpush1.msra.mxu0 0.0
    %1257 = vmatprep.subr.mxu0 0.0
    %1258 = vmatpush1.msra.mxu0 0.0
    %1259 = vmatprep.subr.mxu0 0.0
    %1260 = vmatpush1.msra.mxu0 0.0
    %1261 = vmatprep.subr.mxu0 0.0
    %1262 = vmatpush1.msra.mxu0 0.0
    %1263 = vmatprep.subr.mxu0 0.0
    %1264 = vmatpush1.msra.mxu0 0.0
    %1265 = vmatprep.subr.mxu0 0.0
    %1266 = vmatpush1.msra.mxu0 0.0
    %1267 = vmatprep.subr.mxu0 0.0
    %1268 = vmatpush1.msra.mxu0 0.0
    %1269 = vmatprep.subr.mxu0 0.0
    %1270 = vmatpush1.msra.mxu0 0.0
    %1271 = vmatprep.subr.mxu0 0.0
    %1272 = vmatpush1.msra.mxu0 0.0
    %1273 = vmatprep.subr.mxu0 0.0
    %1274 = vmatpush1.msra.mxu0 0.0
    %1275 = vmatprep.subr.mxu0 0.0
    %1276 = vmatpush1.msra.mxu0 0.0
    %1277 = vmatprep.subr.mxu0 0.0
    %1278 = vmatpush1.msra.mxu0 0.0
    %1279 = vmatprep.subr.mxu0 0.0
    %1280 = vmatpush1.msra.mxu0 0.0
    %1281 = vmatprep.subr.mxu0 0.0
    %1282 = vmatpush1.msra.mxu0 0.0
    %1283 = vmatprep.subr.mxu0 0.0
    %1284 = vmatpush1.msra.mxu0 0.0
    %1285 = vmatprep.mubr.f32.mxu0 0.0
    %1286 = vmatmul.mubr.f32.gmra.mrb[0].mxu0 %v1219
    %v1287 = vpop.f32.mrb[0].mxu0
    %v1288 = vadd.f32 0.0, %v1287
    %v1289 = vpop.f32.mrb[0].mxu0
    %1290 = vdwg.mxu0
    %1291 = vrot.lane.b32.xlu0 %v190, 112
    %v1292 = vpop.permute.xlu0 %1291
    %1293 = vrot.lane.b32.xlu0 %v284, 112
    %v1294 = vpop.permute.xlu0 %1293
    %v1295 = vsel %vm287, %v1292, 0
    %v1297 = vsel %vm287, %v1294, 0
    %1299 = vmatprep.subr.mxu0 0.0
    %1300 = vmatpush1.xpose.msra.mxu0 %v1297
    %1301 = vmatprep.subr.mxu0 0.0
    %1302 = vmatpush1.xpose.msra.mxu0 0.0
    %1303 = vmatprep.subr.mxu0 0.0
    %1304 = vmatpush1.xpose.msra.mxu0 0.0
    %1305 = vmatprep.subr.mxu0 0.0
    %1306 = vmatpush1.xpose.msra.mxu0 0.0
    %1307 = vmatprep.subr.mxu0 0.0
    %1308 = vmatpush1.xpose.msra.mxu0 0.0
    %1309 = vmatprep.subr.mxu0 0.0
    %1310 = vmatpush1.xpose.msra.mxu0 0.0
    %1311 = vmatprep.subr.mxu0 0.0
    %1312 = vmatpush1.xpose.msra.mxu0 0.0
    %1313 = vmatprep.subr.mxu0 0.0
    %1314 = vmatpush1.xpose.msra.mxu0 0.0
    %1315 = vmatprep.subr.mxu0 0.0
    %1316 = vmatpush1.xpose.msra.mxu0 0.0
    %1317 = vmatprep.subr.mxu0 0.0
    %1318 = vmatpush1.xpose.msra.mxu0 0.0
    %1319 = vmatprep.subr.mxu0 0.0
    %1320 = vmatpush1.xpose.msra.mxu0 0.0
    %1321 = vmatprep.subr.mxu0 0.0
    %1322 = vmatpush1.xpose.msra.mxu0 0.0
    %1323 = vmatprep.subr.mxu0 0.0
    %1324 = vmatpush1.xpose.msra.mxu0 0.0
    %1325 = vmatprep.subr.mxu0 0.0
    %1326 = vmatpush1.xpose.msra.mxu0 0.0
    %1327 = vmatprep.subr.mxu0 0.0
    %1328 = vmatpush1.xpose.msra.mxu0 0.0
    %1329 = vmatprep.subr.mxu0 0.0
    %1330 = vmatpush1.xpose.msra.mxu0 0.0
    %1331 = vmatprep.subr.mxu0 0.0
    %1332 = vmatpush1.xpose.msra.mxu0 0.0
    %1333 = vmatprep.subr.mxu0 0.0
    %1334 = vmatpush1.xpose.msra.mxu0 0.0
    %1335 = vmatprep.subr.mxu0 0.0
    %1336 = vmatpush1.xpose.msra.mxu0 0.0
    %1337 = vmatprep.subr.mxu0 0.0
    %1338 = vmatpush1.xpose.msra.mxu0 0.0
    %1339 = vmatprep.subr.mxu0 0.0
    %1340 = vmatpush1.xpose.msra.mxu0 0.0
    %1341 = vmatprep.subr.mxu0 0.0
    %1342 = vmatpush1.xpose.msra.mxu0 0.0
    %1343 = vmatprep.subr.mxu0 0.0
    %1344 = vmatpush1.xpose.msra.mxu0 0.0
    %1345 = vmatprep.subr.mxu0 0.0
    %1346 = vmatpush1.xpose.msra.mxu0 0.0
    %1347 = vmatprep.subr.mxu0 0.0
    %1348 = vmatpush1.xpose.msra.mxu0 0.0
    %1349 = vmatprep.subr.mxu0 0.0
    %1350 = vmatpush1.xpose.msra.mxu0 0.0
    %1351 = vmatprep.subr.mxu0 0.0
    %1352 = vmatpush1.xpose.msra.mxu0 0.0
    %1353 = vmatprep.subr.mxu0 0.0
    %1354 = vmatpush1.xpose.msra.mxu0 0.0
    %1355 = vmatprep.subr.mxu0 0.0
    %1356 = vmatpush1.xpose.msra.mxu0 0.0
    %1357 = vmatprep.subr.mxu0 0.0
    %1358 = vmatpush1.xpose.msra.mxu0 0.0
    %1359 = vmatprep.subr.mxu0 0.0
    %1360 = vmatpush1.xpose.msra.mxu0 0.0
    %1361 = vmatprep.subr.mxu0 0.0
    %1362 = vmatpush1.xpose.msra.mxu0 0.0
    %1363 = vmatprep.mubr.f32.mxu0 0.0
    %1364 = vmatmul.mubr.f32.gmra.mrb[0].mxu0 %v1295
    %v1365 = vpop.f32.mrb[0].mxu0
    %v1366 = vadd.f32 0.0, %v1365
    %v1367 = vpop.f32.mrb[0].mxu0
    %1368 = vdwg.mxu0
    %v1369 = vsel %vm287, %v1366, -inf
    %1370 = vmax.xlane.f32.xlu0 %v1369
    %v1371 = vpop.xlane.xlu0 %1370
    %v1372 = vsub.f32 %v1366, %v1371
    %v1373 = vmul.f32 %v1372, 1.442695
    %v1374 = vpow.pop %v1373
    %v1375 = vsel %vm287, %v1374, 0.0
    %1376 = vadd.xlane.f32.xlu0 %v1375
    %v1377 = vpop.xlane.xlu0 %1376
    %v1378 = vrcp.pop %v1377
    %v1379 = vmul.f32 %v1374, %v1378
    %1380 = vrot.lane.b32.xlu0 %v284, 80
    %v1381 = vpop.permute.xlu0 %1380
    %v1384 = vsel %vm287, %v1379, 0
    %1386 = vmatprep.subr.mxu0 0.0
    %1387 = vmatpush1.msra.mxu0 %v1381
    %1388 = vmatprep.subr.mxu0 0.0
    %1389 = vmatpush1.msra.mxu0 0.0
    %1390 = vmatprep.subr.mxu0 0.0
    %1391 = vmatpush1.msra.mxu0 0.0
    %1392 = vmatprep.subr.mxu0 0.0
    %1393 = vmatpush1.msra.mxu0 0.0
    %1394 = vmatprep.subr.mxu0 0.0
    %1395 = vmatpush1.msra.mxu0 0.0
    %1396 = vmatprep.subr.mxu0 0.0
    %1397 = vmatpush1.msra.mxu0 0.0
    %1398 = vmatprep.subr.mxu0 0.0
    %1399 = vmatpush1.msra.mxu0 0.0
    %1400 = vmatprep.subr.mxu0 0.0
    %1401 = vmatpush1.msra.mxu0 0.0
    %1402 = vmatprep.subr.mxu0 0.0
    %1403 = vmatpush1.msra.mxu0 0.0
    %1404 = vmatprep.subr.mxu0 0.0
    %1405 = vmatpush1.msra.mxu0 0.0
    %1406 = vmatprep.subr.mxu0 0.0
    %1407 = vmatpush1.msra.mxu0 0.0
    %1408 = vmatprep.subr.mxu0 0.0
    %1409 = vmatpush1.msra.mxu0 0.0
    %1410 = vmatprep.subr.mxu0 0.0
    %1411 = vmatpush1.msra.mxu0 0.0
    %1412 = vmatprep.subr.mxu0 0.0
    %1413 = vmatpush1.msra.mxu0 0.0
    %1414 = vmatprep.subr.mxu0 0.0
    %1415 = vmatpush1.msra.mxu0 0.0
    %1416 = vmatprep.subr.mxu0 0.0
    %1417 = vmatpush1.msra.mxu0 0.0
    %1418 = vmatprep.subr.mxu0 0.0
    %1419 = vmatpush1.msra.mxu0 0.0
    %1420 = vmatprep.subr.mxu0 0.0
    %1421 = vmatpush1.msra.mxu0 0.0
    %1422 = vmatprep.subr.mxu0 0.0
    %1423 = vmatpush1.msra.mxu0 0.0
    %1424 = vmatprep.subr.mxu0 0.0
    %1425 = vmatpush1.msra.mxu0 0.0
    %1426 = vmatprep.subr.mxu0 0.0
    %1427 = vmatpush1.msra.mxu0 0.0
    %1428 = vmatprep.subr.mxu0 0.0
    %1429 = vmatpush1.msra.mxu0 0.0
    %1430 = vmatprep.subr.mxu0 0.0
    %1431 = vmatpush1.msra.mxu0 0.0
    %1432 = vmatprep.subr.mxu0 0.0
    %1433 = vmatpush1.msra.mxu0 0.0
    %1434 = vmatprep.subr.mxu0 0.0
    %1435 = vmatpush1.msra.mxu0 0.0
    %1436 = vmatprep.subr.mxu0 0.0
    %1437 = vmatpush1.msra.mxu0 0.0
    %1438 = vmatprep.subr.mxu0 0.0
    %1439 = vmatpush1.msra.mxu0 0.0
    %1440 = vmatprep.subr.mxu0 0.0
    %1441 = vmatpush1.msra.mxu0 0.0
    %1442 = vmatprep.subr.mxu0 0.0
    %1443 = vmatpush1.msra.mxu0 0.0
    %1444 = vmatprep.subr.mxu0 0.0
    %1445 = vmatpush1.msra.mxu0 0.0
    %1446 = vmatprep.subr.mxu0 0.0
    %1447 = vmatpush1.msra.mxu0 0.0
    %1448 = vmatprep.subr.mxu0 0.0
    %1449 = vmatpush1.msra.mxu0 0.0
    %1450 = vmatprep.mubr.f32.mxu0 0.0
    %1451 = vmatmul.mubr.f32.gmra.mrb[0].mxu0 %v1384
    %v1452 = vpop.f32.mrb[0].mxu0
    %v1453 = vadd.f32 0.0, %v1452
    %v1454 = vpop.f32.mrb[0].mxu0
    %1455 = vdwg.mxu0
    %1456 = vrot.lane.b32.xlu0 %v190, 104
    %v1457 = vpop.permute.xlu0 %1456
    %1458 = vrot.lane.b32.xlu0 %v284, 104
    %v1459 = vpop.permute.xlu0 %1458
    %v1460 = vsel %vm287, %v1457, 0
    %v1462 = vsel %vm287, %v1459, 0
    %1464 = vmatprep.subr.mxu0 0.0
    %1465 = vmatpush1.xpose.msra.mxu0 %v1462
    %1466 = vmatprep.subr.mxu0 0.0
    %1467 = vmatpush1.xpose.msra.mxu0 0.0
    %1468 = vmatprep.subr.mxu0 0.0
    %1469 = vmatpush1.xpose.msra.mxu0 0.0
    %1470 = vmatprep.subr.mxu0 0.0
    %1471 = vmatpush1.xpose.msra.mxu0 0.0
    %1472 = vmatprep.subr.mxu0 0.0
    %1473 = vmatpush1.xpose.msra.mxu0 0.0
    %1474 = vmatprep.subr.mxu0 0.0
    %1475 = vmatpush1.xpose.msra.mxu0 0.0
    %1476 = vmatprep.subr.mxu0 0.0
    %1477 = vmatpush1.xpose.msra.mxu0 0.0
    %1478 = vmatprep.subr.mxu0 0.0
    %1479 = vmatpush1.xpose.msra.mxu0 0.0
    %1480 = vmatprep.subr.mxu0 0.0
    %1481 = vmatpush1.xpose.msra.mxu0 0.0
    %1482 = vmatprep.subr.mxu0 0.0
    %1483 = vmatpush1.xpose.msra.mxu0 0.0
    %1484 = vmatprep.subr.mxu0 0.0
    %1485 = vmatpush1.xpose.msra.mxu0 0.0
    %1486 = vmatprep.subr.mxu0 0.0
    %1487 = vmatpush1.xpose.msra.mxu0 0.0
    %1488 = vmatprep.subr.mxu0 0.0
    %1489 = vmatpush1.xpose.msra.mxu0 0.0
    %1490 = vmatprep.subr.mxu0 0.0
    %1491 = vmatpush1.xpose.msra.mxu0 0.0
    %1492 = vmatprep.subr.mxu0 0.0
    %1493 = vmatpush1.xpose.msra.mxu0 0.0
    %1494 = vmatprep.subr.mxu0 0.0
    %1495 = vmatpush1.xpose.msra.mxu0 0.0
    %1496 = vmatprep.subr.mxu0 0.0
    %1497 = vmatpush1.xpose.msra.mxu0 0.0
    %1498 = vmatprep.subr.mxu0 0.0
    %1499 = vmatpush1.xpose.msra.mxu0 0.0
    %1500 = vmatprep.subr.mxu0 0.0
    %1501 = vmatpush1.xpose.msra.mxu0 0.0
    %1502 = vmatprep.subr.mxu0 0.0
    %1503 = vmatpush1.xpose.msra.mxu0 0.0
    %1504 = vmatprep.subr.mxu0 0.0
    %1505 = vmatpush1.xpose.msra.mxu0 0.0
    %1506 = vmatprep.subr.mxu0 0.0
    %1507 = vmatpush1.xpose.msra.mxu0 0.0
    %1508 = vmatprep.subr.mxu0 0.0
    %1509 = vmatpush1.xpose.msra.mxu0 0.0
    %1510 = vmatprep.subr.mxu0 0.0
    %1511 = vmatpush1.xpose.msra.mxu0 0.0
    %1512 = vmatprep.subr.mxu0 0.0
    %1513 = vmatpush1.xpose.msra.mxu0 0.0
    %1514 = vmatprep.subr.mxu0 0.0
    %1515 = vmatpush1.xpose.msra.mxu0 0.0
    %1516 = vmatprep.subr.mxu0 0.0
    %1517 = vmatpush1.xpose.msra.mxu0 0.0
    %1518 = vmatprep.subr.mxu0 0.0
    %1519 = vmatpush1.xpose.msra.mxu0 0.0
    %1520 = vmatprep.subr.mxu0 0.0
    %1521 = vmatpush1.xpose.msra.mxu0 0.0
    %1522 = vmatprep.subr.mxu0 0.0
    %1523 = vmatpush1.xpose.msra.mxu0 0.0
    %1524 = vmatprep.subr.mxu0 0.0
    %1525 = vmatpush1.xpose.msra.mxu0 0.0
    %1526 = vmatprep.subr.mxu0 0.0
    %1527 = vmatpush1.xpose.msra.mxu0 0.0
    %1528 = vmatprep.mubr.f32.mxu0 0.0
    %1529 = vmatmul.mubr.f32.gmra.mrb[0].mxu0 %v1460
    %v1530 = vpop.f32.mrb[0].mxu0
    %v1531 = vadd.f32 0.0, %v1530
    %v1532 = vpop.f32.mrb[0].mxu0
    %1533 = vdwg.mxu0
    %v1534 = vsel %vm287, %v1531, -inf
    %1535 = vmax.xlane.f32.xlu0 %v1534
    %v1536 = vpop.xlane.xlu0 %1535
    %v1537 = vsub.f32 %v1531, %v1536
    %v1538 = vmul.f32 %v1537, 1.442695
    %v1539 = vpow.pop %v1538
    %v1540 = vsel %vm287, %v1539, 0.0
    %1541 = vadd.xlane.f32.xlu0 %v1540
    %v1542 = vpop.xlane.xlu0 %1541
    %v1543 = vrcp.pop %v1542
    %v1544 = vmul.f32 %v1539, %v1543
    %1545 = vrot.lane.b32.xlu0 %v284, 72
    %v1546 = vpop.permute.xlu0 %1545
    %v1549 = vsel %vm287, %v1544, 0
    %1551 = vmatprep.subr.mxu0 0.0
    %1552 = vmatpush1.msra.mxu0 %v1546
    %1553 = vmatprep.subr.mxu0 0.0
    %1554 = vmatpush1.msra.mxu0 0.0
    %1555 = vmatprep.subr.mxu0 0.0
    %1556 = vmatpush1.msra.mxu0 0.0
    %1557 = vmatprep.subr.mxu0 0.0
    %1558 = vmatpush1.msra.mxu0 0.0
    %1559 = vmatprep.subr.mxu0 0.0
    %1560 = vmatpush1.msra.mxu0 0.0
    %1561 = vmatprep.subr.mxu0 0.0
    %1562 = vmatpush1.msra.mxu0 0.0
    %1563 = vmatprep.subr.mxu0 0.0
    %1564 = vmatpush1.msra.mxu0 0.0
    %1565 = vmatprep.subr.mxu0 0.0
    %1566 = vmatpush1.msra.mxu0 0.0
    %1567 = vmatprep.subr.mxu0 0.0
    %1568 = vmatpush1.msra.mxu0 0.0
    %1569 = vmatprep.subr.mxu0 0.0
    %1570 = vmatpush1.msra.mxu0 0.0
    %1571 = vmatprep.subr.mxu0 0.0
    %1572 = vmatpush1.msra.mxu0 0.0
    %1573 = vmatprep.subr.mxu0 0.0
    %1574 = vmatpush1.msra.mxu0 0.0
    %1575 = vmatprep.subr.mxu0 0.0
    %1576 = vmatpush1.msra.mxu0 0.0
    %1577 = vmatprep.subr.mxu0 0.0
    %1578 = vmatpush1.msra.mxu0 0.0
    %1579 = vmatprep.subr.mxu0 0.0
    %1580 = vmatpush1.msra.mxu0 0.0
    %1581 = vmatprep.subr.mxu0 0.0
    %1582 = vmatpush1.msra.mxu0 0.0
    %1583 = vmatprep.subr.mxu0 0.0
    %1584 = vmatpush1.msra.mxu0 0.0
    %1585 = vmatprep.subr.mxu0 0.0
    %1586 = vmatpush1.msra.mxu0 0.0
    %1587 = vmatprep.subr.mxu0 0.0
    %1588 = vmatpush1.msra.mxu0 0.0
    %1589 = vmatprep.subr.mxu0 0.0
    %1590 = vmatpush1.msra.mxu0 0.0
    %1591 = vmatprep.subr.mxu0 0.0
    %1592 = vmatpush1.msra.mxu0 0.0
    %1593 = vmatprep.subr.mxu0 0.0
    %1594 = vmatpush1.msra.mxu0 0.0
    %1595 = vmatprep.subr.mxu0 0.0
    %1596 = vmatpush1.msra.mxu0 0.0
    %1597 = vmatprep.subr.mxu0 0.0
    %1598 = vmatpush1.msra.mxu0 0.0
    %1599 = vmatprep.subr.mxu0 0.0
    %1600 = vmatpush1.msra.mxu0 0.0
    %1601 = vmatprep.subr.mxu0 0.0
    %1602 = vmatpush1.msra.mxu0 0.0
    %1603 = vmatprep.subr.mxu0 0.0
    %1604 = vmatpush1.msra.mxu0 0.0
    %1605 = vmatprep.subr.mxu0 0.0
    %1606 = vmatpush1.msra.mxu0 0.0
    %1607 = vmatprep.subr.mxu0 0.0
    %1608 = vmatpush1.msra.mxu0 0.0
    %1609 = vmatprep.subr.mxu0 0.0
    %1610 = vmatpush1.msra.mxu0 0.0
    %1611 = vmatprep.subr.mxu0 0.0
    %1612 = vmatpush1.msra.mxu0 0.0
    %1613 = vmatprep.subr.mxu0 0.0
    %1614 = vmatpush1.msra.mxu0 0.0
    %1615 = vmatprep.mubr.f32.mxu0 0.0
    %1616 = vmatmul.mubr.f32.gmra.mrb[0].mxu0 %v1549
    %v1617 = vpop.f32.mrb[0].mxu0
    %v1618 = vadd.f32 0.0, %v1617
    %v1619 = vpop.f32.mrb[0].mxu0
    %1620 = vdwg.mxu0
    %1622 = vrot.lane.b32.xlu0 %v1288, 8
    %v1623 = vpop.permute.xlu0 %1622
    %1626 = vrot.lane.b32.xlu0 %v1453, 16
    %v1627 = vpop.permute.xlu0 %1626
    %1630 = vrot.lane.b32.xlu0 %v1618, 24
    %v1631 = vpop.permute.xlu0 %1630
    %v1633 = vsel %vm287, %v1123, %v1623
    %v1634 = vsel %vm959, %v1633, %v1627
    %v1635 = vsel %vm961, %v1634, %v1631
    %v1636 = vld [vmem:[#allocation10] sm:$0xff]
    %v1637 = vld [vmem:[#allocation10 + $0x8] sm:$0xff]
    %v1638 = vld [vmem:[#allocation10 + $0x10] sm:$0xff]
    %v1639 = vld [vmem:[#allocation10 + $0x18] sm:$0xff]
    %v1640 = vld [vmem:[%s7] sm:$0x1]
    %v1642 = vlaneseq
    %v1643 = vshrl.u32 %v1642, 7
    %v1644 = vsub.s32 0, %v1643
    %v1645 = vrot.slane %v1640, %v1644
    %v1648 = vsel %vm111, %v962, 0
    %v1651 = vsel %vm111, %v1635, 0
    %1653 = vmatprep.subr.mxu0 0.0
    %1654 = vmatpush1.msra.mxu0 %v1636
    %1655 = vmatprep.subr.mxu0 0.0
    %1656 = vmatpush1.msra.mxu0 %v1637
    %1657 = vmatprep.subr.mxu0 0.0
    %1658 = vmatpush1.msra.mxu0 %v1638
    %1659 = vmatprep.subr.mxu0 0.0
    %1660 = vmatpush1.msra.mxu0 %v1639
    %1661 = vmatprep.subr.mxu0 0.0
    %1662 = vmatpush1.msra.mxu0 0.0
    %1663 = vmatprep.subr.mxu0 0.0
    %1664 = vmatpush1.msra.mxu0 0.0
    %1665 = vmatprep.subr.mxu0 0.0
    %1666 = vmatpush1.msra.mxu0 0.0
    %1667 = vmatprep.subr.mxu0 0.0
    %1668 = vmatpush1.msra.mxu0 0.0
    %1669 = vmatprep.subr.mxu0 0.0
    %1670 = vmatpush1.msra.mxu0 0.0
    %1671 = vmatprep.subr.mxu0 0.0
    %1672 = vmatpush1.msra.mxu0 0.0
    %1673 = vmatprep.subr.mxu0 0.0
    %1674 = vmatpush1.msra.mxu0 0.0
    %1675 = vmatprep.subr.mxu0 0.0
    %1676 = vmatpush1.msra.mxu0 0.0
    %1677 = vmatprep.subr.mxu0 0.0
    %1678 = vmatpush1.msra.mxu0 0.0
    %1679 = vmatprep.subr.mxu0 0.0
    %1680 = vmatpush1.msra.mxu0 0.0
    %1681 = vmatprep.subr.mxu0 0.0
    %1682 = vmatpush1.msra.mxu0 0.0
    %1683 = vmatprep.subr.mxu0 0.0
    %1684 = vmatpush1.msra.mxu0 0.0
    %1685 = vmatprep.subr.mxu0 0.0
    %1686 = vmatpush1.msra.mxu0 0.0
    %1687 = vmatprep.subr.mxu0 0.0
    %1688 = vmatpush1.msra.mxu0 0.0
    %1689 = vmatprep.subr.mxu0 0.0
    %1690 = vmatpush1.msra.mxu0 0.0
    %1691 = vmatprep.subr.mxu0 0.0
    %1692 = vmatpush1.msra.mxu0 0.0
    %1693 = vmatprep.subr.mxu0 0.0
    %1694 = vmatpush1.msra.mxu0 0.0
    %1695 = vmatprep.subr.mxu0 0.0
    %1696 = vmatpush1.msra.mxu0 0.0
    %1697 = vmatprep.subr.mxu0 0.0
    %1698 = vmatpush1.msra.mxu0 0.0
    %1699 = vmatprep.subr.mxu0 0.0
    %1700 = vmatpush1.msra.mxu0 0.0
    %1701 = vmatprep.subr.mxu0 0.0
    %1702 = vmatpush1.msra.mxu0 0.0
    %1703 = vmatprep.subr.mxu0 0.0
    %1704 = vmatpush1.msra.mxu0 0.0
    %1705 = vmatprep.subr.mxu0 0.0
    %1706 = vmatpush1.msra.mxu0 0.0
    %1707 = vmatprep.subr.mxu0 0.0
    %1708 = vmatpush1.msra.mxu0 0.0
    %1709 = vmatprep.subr.mxu0 0.0
    %1710 = vmatpush1.msra.mxu0 0.0
    %1711 = vmatprep.subr.mxu0 0.0
    %1712 = vmatpush1.msra.mxu0 0.0
    %1713 = vmatprep.subr.mxu0 0.0
    %1714 = vmatpush1.msra.mxu0 0.0
    %1715 = vmatprep.subr.mxu0 0.0
    %1716 = vmatpush1.msra.mxu0 0.0
    %1717 = vmatprep.mubr.f32.mxu0 0.0
    %1718 = vmatmul.mubr.f32.gmra.mrb[0].mxu0 %v1648
    %v1719 = vpop.f32.mrb[0].mxu0
    %v1720 = vadd.f32 %v1645, %v1719
    %v1721 = vpop.f32.mrb[0].mxu0
    %1722 = vmatprep.mubr.f32.mxu0 0.0
    %1723 = vmatmul.mubr.f32.gmra.mrb[0].mxu0 %v1651
    %v1724 = vpop.f32.mrb[0].mxu0
    %v1725 = vadd.f32 %v1645, %v1724
    %v1726 = vpop.f32.mrb[0].mxu0
    %1727 = vdwg.mxu0
    %1728 = vst.msk [vmem:[#allocation11] sm:$0xff] %vm111, %v1720
    %1729 = vst.msk [vmem:[#allocation11 + $0x8] sm:$0xff] %vm111, %v1725
    // Predicated region
    $region54: #{tpu_custom_call.1} parent=1 // pred_check
      _
    $region55: #{tpu_custom_call.1} parent=1 // pred_check_branch
      %1731 = sbr.rel (0) target = $region57
    $region56: #{tpu_custom_call.1} parent=1 // pred_region
      %s1733 = ssub.s32 256, 256
      %1734 = vsyncadd [#allocation4], %s1733
      %s1735 = sshll.u32 [#allocation11], 4
      %s1736 = int_to_ptr.vmem [resolvable:$true] %s1735
      %1741 = dma.vmem_to_hbm [thread:$0]  %s1736, 256, %s8, [#allocation4], 128, 128, 8
    $region57: #{tpu_custom_call.1} parent=1 // pred_fallthru
      _
    // Predicated region
    $region58: #{tpu_custom_call.1} parent=1 // pred_check
      _
    $region59: #{tpu_custom_call.1} parent=1 // pred_check_branch
      %1743 = sbr.rel (0) target = $region61
    $region60: #{tpu_custom_call.1} parent=1 // pred_region
      %1744 = dma.done [#allocation4], 256
    $region61: #{tpu_custom_call.1} parent=1 // pred_fallthru
      _
    %1745 = vsyncpa [#allocation3], 1
    %1746 = vsyncpa [#allocation6], 1
    %1747 = vsyncpa [#allocation9], 1
    %1748 = vsyncpa [#allocation4], 1

</llo_original>
